<compile_context>
chip_gen: v7x
topology: tpu7x:2x2x1
jax: 0.10.0
libtpu: 0.0.40
codegen_flags: <defaults>
</compile_context>

<pallas_src>
import functools

import jax
import jax.numpy as jnp
from jax.experimental import pallas as pl
from jax.experimental.pallas import tpu as pltpu

_BN_EPS = 1e-5
_LANE = 128
_MAX_TM = 1024                    # conv matmul rows per M tile
_MAX_TK = 1024                    # conv matmul K tile
_MAX_TA = 2048                    # affine/LeakyReLU rows per tile
_VMEM_LIMIT = 32 * 1024 * 1024    # safe on v5e/v6e/v7x; tiles sized well under


def _cdiv(a, b):
    return -(-a // b)


def _round_up(x, m):
    return _cdiv(x, m) * m


# ----------------------------- Pallas kernels ------------------------------

def _conv_mm_kernel(a_ref, b_ref, shift_ref, o_ref, acc_ref, *, neg_slope):
    """K-tiled im2col matmul (bf16 x bf16 -> f32 accumulate) with a fused
    bias + LeakyReLU epilogue applied on the last K step."""
    k = pl.program_id(1)

    @pl.when(k == 0)
    def _():
        acc_ref[...] = jnp.zeros_like(acc_ref)

    acc_ref[...] += jnp.dot(a_ref[...], b_ref[...],
                            preferred_element_type=jnp.float32)

    @pl.when(k == pl.num_programs(1) - 1)
    def _():
        out = acc_ref[...] + shift_ref[...]
        if neg_slope != 1.0:
            out = jnp.where(out >= 0, out, neg_slope * out)
        o_ref[...] = out.astype(o_ref.dtype)


def _conv_mm_stats_kernel(a_ref, b_ref, o_ref, sum_ref, sq_ref, acc_ref, *,
                          m_true, tm, need_mask):
    """K-tiled matmul; on the last K step writes the raw conv output plus the
    per-M-block channel sum / sum-of-squares (training-mode BatchNorm stats).
    Stats are per M block (reduced in the wrapper) so the M axis can be
    'parallel' (megacore safe) without any cross-block accumulation race."""
    k = pl.program_id(1)

    @pl.when(k == 0)
    def _():
        acc_ref[...] = jnp.zeros_like(acc_ref)

    acc_ref[...] += jnp.dot(a_ref[...], b_ref[...],
                            preferred_element_type=jnp.float32)

    @pl.when(k == pl.num_programs(1) - 1)
    def _():
        acc = acc_ref[...]
        o_ref[...] = acc.astype(o_ref.dtype)
        if need_mask:  # drop out-of-range rows of the partial boundary block
            rows = (jax.lax.broadcasted_iota(jnp.int32, acc.shape, 0)
                    + pl.program_id(0) * tm)
            acc = jnp.where(rows < m_true, acc, 0.0)
        s1 = jnp.sum(acc, axis=0, keepdims=True)
        s2 = jnp.sum(acc * acc, axis=0, keepdims=True)
        sum_ref[...] = s1.reshape(sum_ref.shape)
        sq_ref[...] = s2.reshape(sq_ref.shape)


def _affine_act_kernel(z_ref, scale_ref, shift_ref, o_ref, *, neg_slope):
    """Per-channel affine (folded BatchNorm) + LeakyReLU, lane-dense."""
    out = z_ref[...] * scale_ref[...] + shift_ref[...]
    o_ref[...] = jnp.where(out >= 0, out, neg_slope * out)


# ------------------------------ kernel wrappers -----------------------------

def _choose_tk(K):
    if K <= _MAX_TK:
        return K
    for t in (1024, 512, 256, 128):
        if K % t == 0:
            return t
    return K


def _conv_cost(M, K, Cp, a, b):
    return pl.CostEstimate(flops=2 * M * K * Cp, transcendentals=0,
                           bytes_accessed=a.size * 2 + b.size * 2 + M * Cp * 4)


def _conv_mm(a, b, shift, *, neg_slope):
    M, K = a.shape
    Cp = b.shape[1]
    tm = M if M <= _MAX_TM else _MAX_TM
    tk = _choose_tk(K)
    grid = (_cdiv(M, tm), _cdiv(K, tk))
    return pl.pallas_call(
        functools.partial(_conv_mm_kernel, neg_slope=neg_slope),
        out_shape=jax.ShapeDtypeStruct((M, Cp), jnp.float32),
        grid_spec=pltpu.PrefetchScalarGridSpec(
            num_scalar_prefetch=0,
            grid=grid,
            in_specs=[
                pl.BlockSpec((tm, tk), lambda i, k: (i, k)),
                pl.BlockSpec((tk, Cp), lambda i, k: (k, 0)),
                pl.BlockSpec((1, Cp), lambda i, k: (0, 0)),
            ],
            out_specs=pl.BlockSpec((tm, Cp), lambda i, k: (i, 0)),
            scratch_shapes=[pltpu.VMEM((tm, Cp), jnp.float32)],
        ),
        compiler_params=pltpu.CompilerParams(
            dimension_semantics=("parallel", "arbitrary"),
            vmem_limit_bytes=_VMEM_LIMIT),
        cost_estimate=_conv_cost(M, K, Cp, a, b),
    )(a, b, shift)


def _conv_mm_stats(a, b):
    M, K = a.shape
    Cp = b.shape[1]
    tm = M if M <= _MAX_TM else _MAX_TM
    tk = _choose_tk(K)
    mt, kt = _cdiv(M, tm), _cdiv(K, tk)
    kernel = functools.partial(_conv_mm_stats_kernel, m_true=M, tm=tm,
                               need_mask=(M % tm) != 0)
    return pl.pallas_call(
        kernel,
        out_shape=(
            jax.ShapeDtypeStruct((M, Cp), jnp.float32),
            jax.ShapeDtypeStruct((mt, 1, Cp), jnp.float32),
            jax.ShapeDtypeStruct((mt, 1, Cp), jnp.float32),
        ),
        grid_spec=pltpu.PrefetchScalarGridSpec(
            num_scalar_prefetch=0,
            grid=(mt, kt),
            in_specs=[
                pl.BlockSpec((tm, tk), lambda i, k: (i, k)),
                pl.BlockSpec((tk, Cp), lambda i, k: (k, 0)),
            ],
            out_specs=(
                pl.BlockSpec((tm, Cp), lambda i, k: (i, 0)),
                pl.BlockSpec((1, 1, Cp), lambda i, k: (i, 0, 0)),
                pl.BlockSpec((1, 1, Cp), lambda i, k: (i, 0, 0)),
            ),
            scratch_shapes=[pltpu.VMEM((tm, Cp), jnp.float32)],
        ),
        compiler_params=pltpu.CompilerParams(
            dimension_semantics=("parallel", "arbitrary"),
            vmem_limit_bytes=_VMEM_LIMIT),
        cost_estimate=_conv_cost(M, K, Cp, a, b),
    )(a, b)


def _affine_act(z, scale, shift, *, neg_slope):
    M, Cp = z.shape
    tm = M if M <= _MAX_TA else _MAX_TA
    return pl.pallas_call(
        functools.partial(_affine_act_kernel, neg_slope=neg_slope),
        out_shape=jax.ShapeDtypeStruct((M, Cp), jnp.float32),
        grid_spec=pltpu.PrefetchScalarGridSpec(
            num_scalar_prefetch=0,
            grid=(_cdiv(M, tm),),
            in_specs=[
                pl.BlockSpec((tm, Cp), lambda i: (i, 0)),
                pl.BlockSpec((1, Cp), lambda i: (0, 0)),
                pl.BlockSpec((1, Cp), lambda i: (0, 0)),
            ],
            out_specs=pl.BlockSpec((tm, Cp), lambda i: (i, 0)),
        ),
        compiler_params=pltpu.CompilerParams(
            dimension_semantics=("parallel",),
            vmem_limit_bytes=_VMEM_LIMIT),
    )(z, scale, shift)


# --------------------------------- JAX glue ---------------------------------

def _reflect_pad(x):
    return jnp.pad(x, ((0, 0), (1, 1), (1, 1), (0, 0)), mode="reflect")


def _im2col(x, k, stride):
    """x: [N, Hp, Wp, C] -> ([N*Ho*Wo, k*k*C], Ho, Wo), patch order (kh,kw,c)."""
    N, Hp, Wp, C = x.shape
    Ho = (Hp - k) // stride + 1
    Wo = (Wp - k) // stride + 1
    cols = []
    for di in range(k):
        for dj in range(k):
            cols.append(x[:, di:di + stride * (Ho - 1) + 1:stride,
                          dj:dj + stride * (Wo - 1) + 1:stride, :])
    patches = jnp.stack(cols, axis=3)            # [N, Ho, Wo, k*k, C]
    return patches.reshape(N * Ho * Wo, k * k * C), Ho, Wo


def _conv_layer(x, w, bias=None, *, stride, neg_slope, bn=None):
    """Conv2d(k=4, pad=1 reflect) [+ BatchNorm2d (batch stats)] [+ LeakyReLU].
    x: NHWC float32, w: [Cout, Cin, kH, kW] (PyTorch layout)."""
    N = x.shape[0]
    Cout, Cin, kh, kw = w.shape
    Cp = _round_up(Cout, _LANE)      # lane-dense output (Cout=1/64 -> 128)

    # TODO(synk): im2col is still materialized in HBM via XLA (≈16x activation
    # traffic); fusing it into the matmul kernel needs overlapping/strided
    # input windows that BlockSpec cannot express robustly, so it stays here.
    xp = _reflect_pad(x).astype(jnp.bfloat16)    # bf16 MXU operands
    a, Ho, Wo = _im2col(xp, kh, stride)
    b = jnp.transpose(w, (2, 3, 1, 0)).reshape(kh * kw * Cin, Cout)
    b = jnp.pad(b, ((0, 0), (0, Cp - Cout))).astype(jnp.bfloat16)
    M = N * Ho * Wo

    if bn is None:
        bias = jnp.zeros((Cout,), jnp.float32) if bias is None else bias
        shift = jnp.pad(bias, (0, Cp - Cout)).reshape(1, Cp)
        z = _conv_mm(a, b, shift, neg_slope=neg_slope)
        out = z[:, :Cout]
    else:
        gamma, beta = bn
        z, s1, s2 = _conv_mm_stats(a, b)
        s1 = jnp.sum(s1[:, 0, :Cout], axis=0)
        s2 = jnp.sum(s2[:, 0, :Cout], axis=0)
        mean = s1 / M
        # biased variance (PyTorch train-mode BN); clamp E[x^2]-E[x]^2 >= 0
        var = jnp.maximum(s2 / M - mean * mean, 0.0)
        inv = gamma * jax.lax.rsqrt(var + _BN_EPS)
        scale = jnp.pad(inv, (0, Cp - Cout)).reshape(1, Cp)
        shift = jnp.pad(beta - mean * inv, (0, Cp - Cout)).reshape(1, Cp)
        out = _affine_act(z, scale, shift, neg_slope=neg_slope)[:, :Cout]
    return out.reshape(N, Ho, Wo, Cout)


def discriminator_forward(params, x, y):
    """x, y: NCHW float32. Returns NCHW float32 patch logits."""
    h = jnp.concatenate([x, y], axis=1)          # torch.cat(dim=1)
    h = jnp.transpose(h, (0, 2, 3, 1))           # NCHW -> NHWC
    h = _conv_layer(h, params["w_init"], params["b_init"], stride=2,
                    neg_slope=0.2)
    for blk in params["blocks"]:
        h = _conv_layer(h, blk["w"], stride=blk["stride"], neg_slope=0.2,
                        bn=(blk["gamma"], blk["beta"]))
    h = _conv_layer(h, params["w_final"], params["b_final"], stride=1,
                    neg_slope=1.0)               # final conv: no activation
    return jnp.transpose(h, (0, 3, 1, 2))        # NHWC -> NCHW


# ----------------------------- parameter setup ------------------------------

def init_params(key, in_channels=3, features=(64, 128, 256, 512)):
    n_keys = 4 + 3 * (len(features) - 1)
    keys = iter(jax.random.split(key, n_keys))

    def conv_w(cout, cin):
        return 0.1 * jax.random.normal(next(keys), (cout, cin, 4, 4),
                                       jnp.float32)

    params = {
        "w_init": conv_w(features[0], in_channels * 2),
        "b_init": 0.01 * jax.random.normal(next(keys), (features[0],),
                                           jnp.float32),
        "blocks": [],
    }
    cin = features[0]
    for f in features[1:]:
        params["blocks"].append({
            "w": conv_w(f, cin),
            "gamma": 1.0 + 0.1 * jax.random.normal(next(keys), (f,),
                                                   jnp.float32),
            "beta": 0.1 * jax.random.normal(next(keys), (f,), jnp.float32),
            "stride": 1 if f == features[-1] else 2,
        })
        cin = f
    params["w_final"] = conv_w(1, cin)
    params["b_final"] = 0.01 * jax.random.normal(next(keys), (1,),
                                                 jnp.float32)
    return params


# ------------------------------ reference check -----------------------------

def reference_forward(params, x, y, *, match_bf16=True):
    """Pure-JAX reference. With match_bf16=True the conv inputs are rounded to
    bf16 (f32 accumulate), matching the kernel's MXU numerics."""
    def q(t):
        return t.astype(jnp.bfloat16).astype(jnp.float32) if match_bf16 else t

    h = jnp.concatenate([x, y], axis=1)
    h = jnp.transpose(h, (0, 2, 3, 1))

    def conv(h, w, stride):
        hp = jnp.pad(h, ((0, 0), (1, 1), (1, 1), (0, 0)), mode="reflect")
        return jax.lax.conv_general_dilated(
            q(hp), q(jnp.transpose(w, (2, 3, 1, 0))),
            window_strides=(stride, stride), padding="VALID",
            dimension_numbers=("NHWC", "HWIO", "NHWC"),
            precision=jax.lax.Precision.HIGHEST)

    def leaky(v):
        return jnp.where(v >= 0, v, 0.2 * v)

    h = leaky(conv(h, params["w_init"], 2) + params["b_init"])
    for blk in params["blocks"]:
        z = conv(h, blk["w"], blk["stride"])
        mean = jnp.mean(z, axis=(0, 1, 2))
        var = jnp.mean((z - mean) ** 2, axis=(0, 1, 2))
        h = leaky((z - mean) * jax.lax.rsqrt(var + _BN_EPS) * blk["gamma"]
                  + blk["beta"])
    h = conv(h, params["w_final"], 1) + params["b_final"]
    return jnp.transpose(h, (0, 3, 1, 2))


if __name__ == "__main__":
    key = jax.random.PRNGKey(0)
    kx, ky, kp = jax.random.split(key, 3)
    N, C, H, W = 2, 3, 32, 32
    # small synthetic setup: in_channels=3, features scaled down to (8,16,32,64)
    features = (8, 16, 32, 64)
    x = jax.random.normal(kx, (N, C, H, W), jnp.float32)
    y = jax.random.normal(ky, (N, C, H, W), jnp.float32)
    params = init_params(kp, in_channels=C, features=features)

    out = discriminator_forward(params, x, y)
    out = jax.block_until_ready(out)

    assert out.shape == (N, 1, H // 8 - 2, W // 8 - 2), out.shape
    assert bool(jnp.all(jnp.isfinite(out)))

    # primary check: reference with matching bf16-operand numerics
    ref_bf16 = reference_forward(params, x, y, match_bf16=True)
    assert bool(jnp.allclose(out, ref_bf16, rtol=2e-2, atol=2e-2)), \
        float(jnp.max(jnp.abs(out - ref_bf16)))
    # sanity check against the full-f32 reference (bf16 MXU inputs -> looser)
    ref_f32 = reference_forward(params, x, y, match_bf16=False)
    assert bool(jnp.allclose(out, ref_f32, rtol=1e-1, atol=1e-1)), \
        float(jnp.max(jnp.abs(out - ref_f32)))
    print("KERNEL_OK")
</pallas_src>

<mosaic_0001>
module attributes {stable_mosaic.version = 11 : i64} {
  func.func @_conv_mm_kernel(%arg0: i32, %arg1: i32, %arg2: memref<512x96xbf16, #tpu.memory_space<vmem>>, %arg3: memref<96x128xbf16, #tpu.memory_space<vmem>>, %arg4: memref<1x128xf32, #tpu.memory_space<vmem>>, %arg5: memref<512x128xf32, #tpu.memory_space<vmem>>, %arg6: memref<512x128xf32, #tpu.memory_space<vmem>>) attributes {dimension_semantics = [#tpu.dimension_semantics<parallel>, #tpu.dimension_semantics<arbitrary>], iteration_bounds = array<i64: 1, 1>, scalar_prefetch = 0 : i64, scratch_operands = 1 : i64, tpu.core_type = #tpu.core_type<tc>, window_params = [{transform_indices = @transform_0, window_bounds = array<i64: 512, 96>}, {transform_indices = @transform_1, window_bounds = array<i64: 96, 128>}, {pipeline_mode = #tpu.pipeline_mode<synchronous>, transform_indices = @transform_2, window_bounds = array<i64: 1, 128>}, {transform_indices = @transform_3, window_bounds = array<i64: 512, 128>}]} {
    %c0_i32 = arith.constant 0 : i32
    %0 = arith.cmpi eq, %arg1, %c0_i32 : i32
    %1 = arith.extui %0 : i1 to i32
    %c0_i32_0 = arith.constant 0 : i32
    %2 = arith.cmpi ne, %1, %c0_i32_0 : i32
    scf.if %2 {
      %cst_10 = arith.constant 0.000000e+00 : f32
      %12 = vector.broadcast %cst_10 : f32 to vector<512x128xf32>
      %c0_11 = arith.constant 0 : index
      %c0_12 = arith.constant 0 : index
      %13 = vector.load %arg6[%c0_11, %c0_12] : memref<512x128xf32, #tpu.memory_space<vmem>>, vector<512x128xf32>
      tpu.vector_store %arg6[%c0_11, %c0_12], %12 {strides = array<i32>} : memref<512x128xf32, #tpu.memory_space<vmem>>, vector<512x128xf32>,
    } else {
    }
    %c0 = arith.constant 0 : index
    %c0_1 = arith.constant 0 : index
    %3 = vector.load %arg6[%c0, %c0_1] : memref<512x128xf32, #tpu.memory_space<vmem>>, vector<512x128xf32>
    %c0_2 = arith.constant 0 : index
    %c0_3 = arith.constant 0 : index
    %4 = vector.load %arg2[%c0_2, %c0_3] : memref<512x96xbf16, #tpu.memory_space<vmem>>, vector<512x96xbf16>
    %c0_4 = arith.constant 0 : index
    %c0_5 = arith.constant 0 : index
    %5 = vector.load %arg3[%c0_4, %c0_5] : memref<96x128xbf16, #tpu.memory_space<vmem>>, vector<96x128xbf16>
    %cst = arith.constant dense<0.000000e+00> : vector<512x128xf32>
    %6 = tpu.matmul %4, %5, %cst {dimension_numbers = #tpu.dot_dimension_numbers<[1], [0], [0], [1], [0, 0, 1, 1], [], []>} : vector<512x96xbf16>, vector<96x128xbf16>, vector<512x128xf32> -> vector<512x128xf32>
    %7 = arith.addf %3, %6 : vector<512x128xf32>
    %c0_6 = arith.constant 0 : index
    %c0_7 = arith.constant 0 : index
    %8 = vector.load %arg6[%c0_6, %c0_7] : memref<512x128xf32, #tpu.memory_space<vmem>>, vector<512x128xf32>
    tpu.vector_store %arg6[%c0_6, %c0_7], %7 {strides = array<i32>} : memref<512x128xf32, #tpu.memory_space<vmem>>, vector<512x128xf32>,
    %c0_i32_8 = arith.constant 0 : i32
    %9 = arith.cmpi eq, %arg1, %c0_i32_8 : i32
    %10 = arith.extui %9 : i1 to i32
    %c0_i32_9 = arith.constant 0 : i32
    %11 = arith.cmpi ne, %10, %c0_i32_9 : i32
    scf.if %11 {
      %c0_10 = arith.constant 0 : index
      %c0_11 = arith.constant 0 : index
      %12 = vector.load %arg6[%c0_10, %c0_11] : memref<512x128xf32, #tpu.memory_space<vmem>>, vector<512x128xf32>
      %c0_12 = arith.constant 0 : index
      %c0_13 = arith.constant 0 : index
      %13 = vector.load %arg4[%c0_12, %c0_13] : memref<1x128xf32, #tpu.memory_space<vmem>>, vector<1x128xf32>
      %14 = vector.broadcast %13 : vector<1x128xf32> to vector<512x128xf32>
      %15 = arith.addf %12, %14 : vector<512x128xf32>
      %cst_14 = arith.constant 0.000000e+00 : f32
      %16 = vector.broadcast %cst_14 : f32 to vector<512x128xf32>
      %17 = arith.cmpf oge, %15, %16 : vector<512x128xf32>
      %cst_15 = arith.constant 2.000000e-01 : f32
      %18 = vector.broadcast %cst_15 : f32 to vector<512x128xf32>
      %19 = arith.mulf %18, %15 : vector<512x128xf32>
      %20 = arith.select %17, %15, %19 : vector<512x128xi1>, vector<512x128xf32>
      %c0_16 = arith.constant 0 : index
      %c0_17 = arith.constant 0 : index
      %21 = vector.load %arg5[%c0_16, %c0_17] : memref<512x128xf32, #tpu.memory_space<vmem>>, vector<512x128xf32>
      tpu.vector_store %arg5[%c0_16, %c0_17], %20 {strides = array<i32>} : memref<512x128xf32, #tpu.memory_space<vmem>>, vector<512x128xf32>,
    } else {
    }
    return
  }
  func.func @transform_0(%arg0: i32, %arg1: i32) -> (i32, i32) {
    %c0_i32 = arith.constant 0 : i32
    return %arg0, %arg1 : i32, i32
  }
  func.func @transform_1(%arg0: i32, %arg1: i32) -> (i32, i32) {
    %c0_i32 = arith.constant 0 : i32
    %c0_i32_0 = arith.constant 0 : i32
    return %arg1, %c0_i32 : i32, i32
  }
  func.func @transform_2(%arg0: i32, %arg1: i32) -> (i32, i32) {
    %c0_i32 = arith.constant 0 : i32
    %c0_i32_0 = arith.constant 0 : i32
    %c0_i32_1 = arith.constant 0 : i32
    return %c0_i32, %c0_i32_0 : i32, i32
  }
  func.func @transform_3(%arg0: i32, %arg1: i32) -> (i32, i32) {
    %c0_i32 = arith.constant 0 : i32
    %c0_i32_0 = arith.constant 0 : i32
    return %arg0, %c0_i32 : i32, i32
  }
}

</mosaic_0001>

<llo_original>
// kernel: tpu_custom_call.1
$region0: #{tpu_custom_call.1}
  #allocation0 [shape = 'u32[]', space=smem, size = 0x4, offset = 0x4, fixed_abs, tag = 'smem constant byte address 0x4 - core index']
  #allocation1 [shape = 'u32[144,128]{1,0:T(1,128)}', space=vmem, size = 0x12000, scoped, tag = 'internal scratch']
  #allocation2 [shape = 'f32[512,128]{1,0:T(8,128)}', space=vmem, size = 0x40000, scoped, tag = 'scratch operand']
  %s0 = inlined_call_operand.vmem [shape: bf16[512,96], index: 0, kind: input, shape index: {}]
  %s1 = inlined_call_operand.vmem [shape: bf16[96,128], index: 1, kind: input, shape index: {}]
  %s2 = inlined_call_operand.vmem [shape: f32[1,128], index: 2, kind: input, shape index: {}]
  %s3 = inlined_call_operand.hbm [shape: f32[512,128], index: 3, kind: output, shape index: {}]
  %s4 = sld [smem:[#allocation0]]
  $region30: #{tpu_custom_call.1} parent=0
    _
  %s6 = ssub.s32 1, %s4
  %s7 = scalar_select 0, %s6, %s4
  $region1: #{tpu_custom_call.1} parent=0
    #allocation3 [shape = 'u8[262144]{0}', space=vmem, size = 0x40000, scoped, tag = 'output window, operand 0, single buffered']
    #allocation4 [shape = 's32[1]{0}', space=sflag, size = 0x4, scoped, tag = 'scoped memory for tpu_custom_call.1']
    %8 = vsyncpa [#allocation4], 0
    // Predicated region
    $region2: #{tpu_custom_call.1} parent=1 // pred_check
      _
    $region3: #{tpu_custom_call.1} parent=1 // pred_check_branch
      %10 = sbr.rel (0) target = $region5
    $region4: #{tpu_custom_call.1} parent=1 // pred_region
      _
    $region5: #{tpu_custom_call.1} parent=1 // pred_fallthru
      _
    // Predicated region
    $region6: #{tpu_custom_call.1} parent=1 // pred_check
      _
    $region7: #{tpu_custom_call.1} parent=1 // pred_check_branch
      %12 = sbr.rel (0) target = $region9
    $region8: #{tpu_custom_call.1} parent=1 // pred_region
      _
    $region9: #{tpu_custom_call.1} parent=1 // pred_fallthru
      _
    // Predicated region
    $region10: #{tpu_custom_call.1} parent=1 // pred_check
      _
    $region11: #{tpu_custom_call.1} parent=1 // pred_check_branch
      %14 = sbr.rel (0) target = $region13
    $region12: #{tpu_custom_call.1} parent=1 // pred_region
      _
    $region13: #{tpu_custom_call.1} parent=1 // pred_fallthru
      _
    %p16 = scmp.eq.s32.totalorder 0, 0
    // Predicated region
    $region14: #{tpu_custom_call.1} parent=1 // pred_check
      %p17 = pneg %p16
    $region15: #{tpu_custom_call.1} parent=1 // pred_check_branch
      %19 = sbr.rel (%p17) target = $region17
    $region16: #{tpu_custom_call.1} parent=1 // pred_region
      %20 = vst [vmem:[#allocation2] sm:$0xff] 0.0
      %21 = vst [vmem:[#allocation2 + $0x8] sm:$0xff] 0.0
      %22 = vst [vmem:[#allocation2 + $0x10] sm:$0xff] 0.0
      %23 = vst [vmem:[#allocation2 + $0x18] sm:$0xff] 0.0
      %24 = vst [vmem:[#allocation2 + $0x20] sm:$0xff] 0.0
      %25 = vst [vmem:[#allocation2 + $0x28] sm:$0xff] 0.0
      %26 = vst [vmem:[#allocation2 + $0x30] sm:$0xff] 0.0
      %27 = vst [vmem:[#allocation2 + $0x38] sm:$0xff] 0.0
      %28 = vst [vmem:[#allocation2 + $0x40] sm:$0xff] 0.0
      %29 = vst [vmem:[#allocation2 + $0x48] sm:$0xff] 0.0
      %30 = vst [vmem:[#allocation2 + $0x50] sm:$0xff] 0.0
      %31 = vst [vmem:[#allocation2 + $0x58] sm:$0xff] 0.0
      %32 = vst [vmem:[#allocation2 + $0x60] sm:$0xff] 0.0
      %33 = vst [vmem:[#allocation2 + $0x68] sm:$0xff] 0.0
      %34 = vst [vmem:[#allocation2 + $0x70] sm:$0xff] 0.0
      %35 = vst [vmem:[#allocation2 + $0x78] sm:$0xff] 0.0
      %36 = vst [vmem:[#allocation2 + $0x80] sm:$0xff] 0.0
      %37 = vst [vmem:[#allocation2 + $0x88] sm:$0xff] 0.0
      %38 = vst [vmem:[#allocation2 + $0x90] sm:$0xff] 0.0
      %39 = vst [vmem:[#allocation2 + $0x98] sm:$0xff] 0.0
      %40 = vst [vmem:[#allocation2 + $0xa0] sm:$0xff] 0.0
      %41 = vst [vmem:[#allocation2 + $0xa8] sm:$0xff] 0.0
      %42 = vst [vmem:[#allocation2 + $0xb0] sm:$0xff] 0.0
      %43 = vst [vmem:[#allocation2 + $0xb8] sm:$0xff] 0.0
      %44 = vst [vmem:[#allocation2 + $0xc0] sm:$0xff] 0.0
      %45 = vst [vmem:[#allocation2 + $0xc8] sm:$0xff] 0.0
      %46 = vst [vmem:[#allocation2 + $0xd0] sm:$0xff] 0.0
      %47 = vst [vmem:[#allocation2 + $0xd8] sm:$0xff] 0.0
      %48 = vst [vmem:[#allocation2 + $0xe0] sm:$0xff] 0.0
      %49 = vst [vmem:[#allocation2 + $0xe8] sm:$0xff] 0.0
      %50 = vst [vmem:[#allocation2 + $0xf0] sm:$0xff] 0.0
      %51 = vst [vmem:[#allocation2 + $0xf8] sm:$0xff] 0.0
      %52 = vst [vmem:[#allocation2 + $0x100] sm:$0xff] 0.0
      %53 = vst [vmem:[#allocation2 + $0x108] sm:$0xff] 0.0
      %54 = vst [vmem:[#allocation2 + $0x110] sm:$0xff] 0.0
      %55 = vst [vmem:[#allocation2 + $0x118] sm:$0xff] 0.0
      %56 = vst [vmem:[#allocation2 + $0x120] sm:$0xff] 0.0
      %57 = vst [vmem:[#allocation2 + $0x128] sm:$0xff] 0.0
      %58 = vst [vmem:[#allocation2 + $0x130] sm:$0xff] 0.0
      %59 = vst [vmem:[#allocation2 + $0x138] sm:$0xff] 0.0
      %60 = vst [vmem:[#allocation2 + $0x140] sm:$0xff] 0.0
      %61 = vst [vmem:[#allocation2 + $0x148] sm:$0xff] 0.0
      %62 = vst [vmem:[#allocation2 + $0x150] sm:$0xff] 0.0
      %63 = vst [vmem:[#allocation2 + $0x158] sm:$0xff] 0.0
      %64 = vst [vmem:[#allocation2 + $0x160] sm:$0xff] 0.0
      %65 = vst [vmem:[#allocation2 + $0x168] sm:$0xff] 0.0
      %66 = vst [vmem:[#allocation2 + $0x170] sm:$0xff] 0.0
      %67 = vst [vmem:[#allocation2 + $0x178] sm:$0xff] 0.0
      %68 = vst [vmem:[#allocation2 + $0x180] sm:$0xff] 0.0
      %69 = vst [vmem:[#allocation2 + $0x188] sm:$0xff] 0.0
      %70 = vst [vmem:[#allocation2 + $0x190] sm:$0xff] 0.0
      %71 = vst [vmem:[#allocation2 + $0x198] sm:$0xff] 0.0
      %72 = vst [vmem:[#allocation2 + $0x1a0] sm:$0xff] 0.0
      %73 = vst [vmem:[#allocation2 + $0x1a8] sm:$0xff] 0.0
      %74 = vst [vmem:[#allocation2 + $0x1b0] sm:$0xff] 0.0
      %75 = vst [vmem:[#allocation2 + $0x1b8] sm:$0xff] 0.0
      %76 = vst [vmem:[#allocation2 + $0x1c0] sm:$0xff] 0.0
      %77 = vst [vmem:[#allocation2 + $0x1c8] sm:$0xff] 0.0
      %78 = vst [vmem:[#allocation2 + $0x1d0] sm:$0xff] 0.0
      %79 = vst [vmem:[#allocation2 + $0x1d8] sm:$0xff] 0.0
      %80 = vst [vmem:[#allocation2 + $0x1e0] sm:$0xff] 0.0
      %81 = vst [vmem:[#allocation2 + $0x1e8] sm:$0xff] 0.0
      %82 = vst [vmem:[#allocation2 + $0x1f0] sm:$0xff] 0.0
      %83 = vst [vmem:[#allocation2 + $0x1f8] sm:$0xff] 0.0
    $region17: #{tpu_custom_call.1} parent=1 // pred_fallthru
      _
    %v84 = vld [vmem:[#allocation2] sm:$0xff]
    %v85 = vld [vmem:[#allocation2 + $0x8] sm:$0xff]
    %v86 = vld [vmem:[#allocation2 + $0x10] sm:$0xff]
    %v87 = vld [vmem:[#allocation2 + $0x18] sm:$0xff]
    %v88 = vld [vmem:[#allocation2 + $0x20] sm:$0xff]
    %v89 = vld [vmem:[#allocation2 + $0x28] sm:$0xff]
    %v90 = vld [vmem:[#allocation2 + $0x30] sm:$0xff]
    %v91 = vld [vmem:[#allocation2 + $0x38] sm:$0xff]
    %v92 = vld [vmem:[#allocation2 + $0x40] sm:$0xff]
    %v93 = vld [vmem:[#allocation2 + $0x48] sm:$0xff]
    %v94 = vld [vmem:[#allocation2 + $0x50] sm:$0xff]
    %v95 = vld [vmem:[#allocation2 + $0x58] sm:$0xff]
    %v96 = vld [vmem:[#allocation2 + $0x60] sm:$0xff]
    %v97 = vld [vmem:[#allocation2 + $0x68] sm:$0xff]
    %v98 = vld [vmem:[#allocation2 + $0x70] sm:$0xff]
    %v99 = vld [vmem:[#allocation2 + $0x78] sm:$0xff]
    %v100 = vld [vmem:[#allocation2 + $0x80] sm:$0xff]
    %v101 = vld [vmem:[#allocation2 + $0x88] sm:$0xff]
    %v102 = vld [vmem:[#allocation2 + $0x90] sm:$0xff]
    %v103 = vld [vmem:[#allocation2 + $0x98] sm:$0xff]
    %v104 = vld [vmem:[#allocation2 + $0xa0] sm:$0xff]
    %v105 = vld [vmem:[#allocation2 + $0xa8] sm:$0xff]
    %v106 = vld [vmem:[#allocation2 + $0xb0] sm:$0xff]
    %v107 = vld [vmem:[#allocation2 + $0xb8] sm:$0xff]
    %v108 = vld [vmem:[#allocation2 + $0xc0] sm:$0xff]
    %v109 = vld [vmem:[#allocation2 + $0xc8] sm:$0xff]
    %v110 = vld [vmem:[#allocation2 + $0xd0] sm:$0xff]
    %v111 = vld [vmem:[#allocation2 + $0xd8] sm:$0xff]
    %v112 = vld [vmem:[#allocation2 + $0xe0] sm:$0xff]
    %v113 = vld [vmem:[#allocation2 + $0xe8] sm:$0xff]
    %v114 = vld [vmem:[#allocation2 + $0xf0] sm:$0xff]
    %v115 = vld [vmem:[#allocation2 + $0xf8] sm:$0xff]
    %v116 = vld [vmem:[#allocation2 + $0x100] sm:$0xff]
    %v117 = vld [vmem:[#allocation2 + $0x108] sm:$0xff]
    %v118 = vld [vmem:[#allocation2 + $0x110] sm:$0xff]
    %v119 = vld [vmem:[#allocation2 + $0x118] sm:$0xff]
    %v120 = vld [vmem:[#allocation2 + $0x120] sm:$0xff]
    %v121 = vld [vmem:[#allocation2 + $0x128] sm:$0xff]
    %v122 = vld [vmem:[#allocation2 + $0x130] sm:$0xff]
    %v123 = vld [vmem:[#allocation2 + $0x138] sm:$0xff]
    %v124 = vld [vmem:[#allocation2 + $0x140] sm:$0xff]
    %v125 = vld [vmem:[#allocation2 + $0x148] sm:$0xff]
    %v126 = vld [vmem:[#allocation2 + $0x150] sm:$0xff]
    %v127 = vld [vmem:[#allocation2 + $0x158] sm:$0xff]
    %v128 = vld [vmem:[#allocation2 + $0x160] sm:$0xff]
    %v129 = vld [vmem:[#allocation2 + $0x168] sm:$0xff]
    %v130 = vld [vmem:[#allocation2 + $0x170] sm:$0xff]
    %v131 = vld [vmem:[#allocation2 + $0x178] sm:$0xff]
    %v132 = vld [vmem:[#allocation2 + $0x180] sm:$0xff]
    %v133 = vld [vmem:[#allocation2 + $0x188] sm:$0xff]
    %v134 = vld [vmem:[#allocation2 + $0x190] sm:$0xff]
    %v135 = vld [vmem:[#allocation2 + $0x198] sm:$0xff]
    %v136 = vld [vmem:[#allocation2 + $0x1a0] sm:$0xff]
    %v137 = vld [vmem:[#allocation2 + $0x1a8] sm:$0xff]
    %v138 = vld [vmem:[#allocation2 + $0x1b0] sm:$0xff]
    %v139 = vld [vmem:[#allocation2 + $0x1b8] sm:$0xff]
    %v140 = vld [vmem:[#allocation2 + $0x1c0] sm:$0xff]
    %v141 = vld [vmem:[#allocation2 + $0x1c8] sm:$0xff]
    %v142 = vld [vmem:[#allocation2 + $0x1d0] sm:$0xff]
    %v143 = vld [vmem:[#allocation2 + $0x1d8] sm:$0xff]
    %v144 = vld [vmem:[#allocation2 + $0x1e0] sm:$0xff]
    %v145 = vld [vmem:[#allocation2 + $0x1e8] sm:$0xff]
    %v146 = vld [vmem:[#allocation2 + $0x1f0] sm:$0xff]
    %v147 = vld [vmem:[#allocation2 + $0x1f8] sm:$0xff]
    %v148 = vld [vmem:[%s0] sm:$0xf]
    %v149 = vld [vmem:[%s0 + $0x4] sm:$0xf]
    %v150 = vld [vmem:[%s0 + $0x8] sm:$0xf]
    %v151 = vld [vmem:[%s0 + $0xc] sm:$0xf]
    %v152 = vld [vmem:[%s0 + $0x10] sm:$0xf]
    %v153 = vld [vmem:[%s0 + $0x14] sm:$0xf]
    %v154 = vld [vmem:[%s0 + $0x18] sm:$0xf]
    %v155 = vld [vmem:[%s0 + $0x1c] sm:$0xf]
    %v156 = vld [vmem:[%s0 + $0x20] sm:$0xf]
    %v157 = vld [vmem:[%s0 + $0x24] sm:$0xf]
    %v158 = vld [vmem:[%s0 + $0x28] sm:$0xf]
    %v159 = vld [vmem:[%s0 + $0x2c] sm:$0xf]
    %v160 = vld [vmem:[%s0 + $0x30] sm:$0xf]
    %v161 = vld [vmem:[%s0 + $0x34] sm:$0xf]
    %v162 = vld [vmem:[%s0 + $0x38] sm:$0xf]
    %v163 = vld [vmem:[%s0 + $0x3c] sm:$0xf]
    %v164 = vld [vmem:[%s0 + $0x40] sm:$0xf]
    %v165 = vld [vmem:[%s0 + $0x44] sm:$0xf]
    %v166 = vld [vmem:[%s0 + $0x48] sm:$0xf]
    %v167 = vld [vmem:[%s0 + $0x4c] sm:$0xf]
    %v168 = vld [vmem:[%s0 + $0x50] sm:$0xf]
    %v169 = vld [vmem:[%s0 + $0x54] sm:$0xf]
    %v170 = vld [vmem:[%s0 + $0x58] sm:$0xf]
    %v171 = vld [vmem:[%s0 + $0x5c] sm:$0xf]
    %v172 = vld [vmem:[%s0 + $0x60] sm:$0xf]
    %v173 = vld [vmem:[%s0 + $0x64] sm:$0xf]
    %v174 = vld [vmem:[%s0 + $0x68] sm:$0xf]
    %v175 = vld [vmem:[%s0 + $0x6c] sm:$0xf]
    %v176 = vld [vmem:[%s0 + $0x70] sm:$0xf]
    %v177 = vld [vmem:[%s0 + $0x74] sm:$0xf]
    %v178 = vld [vmem:[%s0 + $0x78] sm:$0xf]
    %v179 = vld [vmem:[%s0 + $0x7c] sm:$0xf]
    %v180 = vld [vmem:[%s0 + $0x80] sm:$0xf]
    %v181 = vld [vmem:[%s0 + $0x84] sm:$0xf]
    %v182 = vld [vmem:[%s0 + $0x88] sm:$0xf]
    %v183 = vld [vmem:[%s0 + $0x8c] sm:$0xf]
    %v184 = vld [vmem:[%s0 + $0x90] sm:$0xf]
    %v185 = vld [vmem:[%s0 + $0x94] sm:$0xf]
    %v186 = vld [vmem:[%s0 + $0x98] sm:$0xf]
    %v187 = vld [vmem:[%s0 + $0x9c] sm:$0xf]
    %v188 = vld [vmem:[%s0 + $0xa0] sm:$0xf]
    %v189 = vld [vmem:[%s0 + $0xa4] sm:$0xf]
    %v190 = vld [vmem:[%s0 + $0xa8] sm:$0xf]
    %v191 = vld [vmem:[%s0 + $0xac] sm:$0xf]
    %v192 = vld [vmem:[%s0 + $0xb0] sm:$0xf]
    %v193 = vld [vmem:[%s0 + $0xb4] sm:$0xf]
    %v194 = vld [vmem:[%s0 + $0xb8] sm:$0xf]
    %v195 = vld [vmem:[%s0 + $0xbc] sm:$0xf]
    %v196 = vld [vmem:[%s0 + $0xc0] sm:$0xf]
    %v197 = vld [vmem:[%s0 + $0xc4] sm:$0xf]
    %v198 = vld [vmem:[%s0 + $0xc8] sm:$0xf]
    %v199 = vld [vmem:[%s0 + $0xcc] sm:$0xf]
    %v200 = vld [vmem:[%s0 + $0xd0] sm:$0xf]
    %v201 = vld [vmem:[%s0 + $0xd4] sm:$0xf]
    %v202 = vld [vmem:[%s0 + $0xd8] sm:$0xf]
    %v203 = vld [vmem:[%s0 + $0xdc] sm:$0xf]
    %v204 = vld [vmem:[%s0 + $0xe0] sm:$0xf]
    %v205 = vld [vmem:[%s0 + $0xe4] sm:$0xf]
    %v206 = vld [vmem:[%s0 + $0xe8] sm:$0xf]
    %v207 = vld [vmem:[%s0 + $0xec] sm:$0xf]
    %v208 = vld [vmem:[%s0 + $0xf0] sm:$0xf]
    %v209 = vld [vmem:[%s0 + $0xf4] sm:$0xf]
    %v210 = vld [vmem:[%s0 + $0xf8] sm:$0xf]
    %v211 = vld [vmem:[%s0 + $0xfc] sm:$0xf]
    %v212 = vld [vmem:[%s1] sm:$0xf]
    %v213 = vld [vmem:[%s1 + $0x4] sm:$0xf]
    %v214 = vld [vmem:[%s1 + $0x8] sm:$0xf]
    %v215 = vld [vmem:[%s1 + $0xc] sm:$0xf]
    %v216 = vld [vmem:[%s1 + $0x10] sm:$0xf]
    %v217 = vld [vmem:[%s1 + $0x14] sm:$0xf]
    %v218 = vld [vmem:[%s1 + $0x18] sm:$0xf]
    %v219 = vld [vmem:[%s1 + $0x1c] sm:$0xf]
    %v220 = vld [vmem:[%s1 + $0x20] sm:$0xf]
    %v221 = vld [vmem:[%s1 + $0x24] sm:$0xf]
    %v222 = vld [vmem:[%s1 + $0x28] sm:$0xf]
    %v223 = vld [vmem:[%s1 + $0x2c] sm:$0xf]
    %v288 = vunpack.c.l.b16 %v148
    %v289 = vunpack.c.l.b16 %v149
    %v290 = vunpack.c.l.b16 %v150
    %v291 = vunpack.c.l.b16 %v151
    %v292 = vunpack.c.l.b16 %v152
    %v293 = vunpack.c.l.b16 %v153
    %v294 = vunpack.c.l.b16 %v154
    %v295 = vunpack.c.l.b16 %v155
    %v296 = vunpack.c.l.b16 %v156
    %v297 = vunpack.c.l.b16 %v157
    %v298 = vunpack.c.l.b16 %v158
    %v299 = vunpack.c.l.b16 %v159
    %v300 = vunpack.c.l.b16 %v160
    %v301 = vunpack.c.l.b16 %v161
    %v302 = vunpack.c.l.b16 %v162
    %v303 = vunpack.c.l.b16 %v163
    %v304 = vunpack.c.l.b16 %v164
    %v305 = vunpack.c.l.b16 %v165
    %v306 = vunpack.c.l.b16 %v166
    %v307 = vunpack.c.l.b16 %v167
    %v308 = vunpack.c.l.b16 %v168
    %v309 = vunpack.c.l.b16 %v169
    %v310 = vunpack.c.l.b16 %v170
    %v311 = vunpack.c.l.b16 %v171
    %v312 = vunpack.c.l.b16 %v172
    %v313 = vunpack.c.l.b16 %v173
    %v314 = vunpack.c.l.b16 %v174
    %v315 = vunpack.c.l.b16 %v175
    %v316 = vunpack.c.l.b16 %v176
    %v317 = vunpack.c.l.b16 %v177
    %v318 = vunpack.c.l.b16 %v178
    %v319 = vunpack.c.l.b16 %v179
    %v320 = vunpack.c.l.b16 %v180
    %v321 = vunpack.c.l.b16 %v181
    %v322 = vunpack.c.l.b16 %v182
    %v323 = vunpack.c.l.b16 %v183
    %v324 = vunpack.c.l.b16 %v184
    %v325 = vunpack.c.l.b16 %v185
    %v326 = vunpack.c.l.b16 %v186
    %v327 = vunpack.c.l.b16 %v187
    %v328 = vunpack.c.l.b16 %v188
    %v329 = vunpack.c.l.b16 %v189
    %v330 = vunpack.c.l.b16 %v190
    %v331 = vunpack.c.l.b16 %v191
    %v332 = vunpack.c.l.b16 %v192
    %v333 = vunpack.c.l.b16 %v193
    %v334 = vunpack.c.l.b16 %v194
    %v335 = vunpack.c.l.b16 %v195
    %v336 = vunpack.c.l.b16 %v196
    %v337 = vunpack.c.l.b16 %v197
    %v338 = vunpack.c.l.b16 %v198
    %v339 = vunpack.c.l.b16 %v199
    %v340 = vunpack.c.l.b16 %v200
    %v341 = vunpack.c.l.b16 %v201
    %v342 = vunpack.c.l.b16 %v202
    %v343 = vunpack.c.l.b16 %v203
    %v344 = vunpack.c.l.b16 %v204
    %v345 = vunpack.c.l.b16 %v205
    %v346 = vunpack.c.l.b16 %v206
    %v347 = vunpack.c.l.b16 %v207
    %v348 = vunpack.c.l.b16 %v208
    %v349 = vunpack.c.l.b16 %v209
    %v350 = vunpack.c.l.b16 %v210
    %v351 = vunpack.c.l.b16 %v211
    %v352 = vpack.c.b16 %v289, %v288
    %v353 = vpack.c.b16 %v291, %v290
    %v354 = vpack.c.b16 %v293, %v292
    %v355 = vpack.c.b16 %v295, %v294
    %v356 = vpack.c.b16 %v297, %v296
    %v357 = vpack.c.b16 %v299, %v298
    %v358 = vpack.c.b16 %v301, %v300
    %v359 = vpack.c.b16 %v303, %v302
    %v360 = vpack.c.b16 %v305, %v304
    %v361 = vpack.c.b16 %v307, %v306
    %v362 = vpack.c.b16 %v309, %v308
    %v363 = vpack.c.b16 %v311, %v310
    %v364 = vpack.c.b16 %v313, %v312
    %v365 = vpack.c.b16 %v315, %v314
    %v366 = vpack.c.b16 %v317, %v316
    %v367 = vpack.c.b16 %v319, %v318
    %v368 = vpack.c.b16 %v321, %v320
    %v369 = vpack.c.b16 %v323, %v322
    %v370 = vpack.c.b16 %v325, %v324
    %v371 = vpack.c.b16 %v327, %v326
    %v372 = vpack.c.b16 %v329, %v328
    %v373 = vpack.c.b16 %v331, %v330
    %v374 = vpack.c.b16 %v333, %v332
    %v375 = vpack.c.b16 %v335, %v334
    %v376 = vpack.c.b16 %v337, %v336
    %v377 = vpack.c.b16 %v339, %v338
    %v378 = vpack.c.b16 %v341, %v340
    %v379 = vpack.c.b16 %v343, %v342
    %v380 = vpack.c.b16 %v345, %v344
    %v381 = vpack.c.b16 %v347, %v346
    %v382 = vpack.c.b16 %v349, %v348
    %v383 = vpack.c.b16 %v351, %v350
    %v396 = vunpack.c.l.b16 %v212
    %v397 = vunpack.c.l.b16 %v213
    %v398 = vunpack.c.l.b16 %v214
    %v399 = vunpack.c.l.b16 %v215
    %v400 = vunpack.c.l.b16 %v216
    %v401 = vunpack.c.l.b16 %v217
    %v402 = vunpack.c.l.b16 %v218
    %v403 = vunpack.c.l.b16 %v219
    %v404 = vunpack.c.l.b16 %v220
    %v405 = vunpack.c.l.b16 %v221
    %v406 = vunpack.c.l.b16 %v222
    %v407 = vunpack.c.l.b16 %v223
    %v408 = vpack.c.b16 %v397, %v396
    %v409 = vpack.c.b16 %v399, %v398
    %v410 = vpack.c.b16 %v401, %v400
    %v411 = vpack.c.b16 %v403, %v402
    %v412 = vpack.c.b16 %v405, %v404
    %v413 = vpack.c.b16 %v407, %v406
    %vm420 = vcmask 785408
    %v422 = vsel %vm420, %v352, 0
    %v425 = vsel %vm420, %v353, 0
    %v428 = vsel %vm420, %v354, 0
    %v431 = vsel %vm420, %v355, 0
    %v434 = vsel %vm420, %v356, 0
    %v437 = vsel %vm420, %v357, 0
    %v440 = vsel %vm420, %v358, 0
    %v443 = vsel %vm420, %v359, 0
    %v446 = vsel %vm420, %v360, 0
    %v449 = vsel %vm420, %v361, 0
    %v452 = vsel %vm420, %v362, 0
    %v455 = vsel %vm420, %v363, 0
    %v458 = vsel %vm420, %v364, 0
    %v461 = vsel %vm420, %v365, 0
    %v464 = vsel %vm420, %v366, 0
    %v467 = vsel %vm420, %v367, 0
    %v470 = vsel %vm420, %v368, 0
    %v473 = vsel %vm420, %v369, 0
    %v476 = vsel %vm420, %v370, 0
    %v479 = vsel %vm420, %v371, 0
    %v482 = vsel %vm420, %v372, 0
    %v485 = vsel %vm420, %v373, 0
    %v488 = vsel %vm420, %v374, 0
    %v491 = vsel %vm420, %v375, 0
    %v494 = vsel %vm420, %v376, 0
    %v497 = vsel %vm420, %v377, 0
    %v500 = vsel %vm420, %v378, 0
    %v503 = vsel %vm420, %v379, 0
    %v506 = vsel %vm420, %v380, 0
    %v509 = vsel %vm420, %v381, 0
    %v512 = vsel %vm420, %v382, 0
    %v515 = vsel %vm420, %v383, 0
    %517 = vmatprep.subr.bf16.mxu0 0
    %518 = vmatpush1.bf16.msra.mxu0 %v408
    %519 = vmatprep.subr.bf16.mxu0 0
    %520 = vmatpush1.bf16.msra.mxu0 %v409
    %521 = vmatprep.subr.bf16.mxu0 0
    %522 = vmatpush1.bf16.msra.mxu0 %v410
    %523 = vmatprep.subr.bf16.mxu0 0
    %524 = vmatpush1.bf16.msra.mxu0 %v411
    %525 = vmatprep.subr.bf16.mxu0 0
    %526 = vmatpush1.bf16.msra.mxu0 %v412
    %527 = vmatprep.subr.bf16.mxu0 0
    %528 = vmatpush1.bf16.msra.mxu0 %v413
    %529 = vmatprep.subr.bf16.mxu0 0
    %530 = vmatpush1.bf16.msra.mxu0 0
    %531 = vmatprep.subr.bf16.mxu0 0
    %532 = vmatpush1.bf16.msra.mxu0 0
    %533 = vmatprep.subr.bf16.mxu0 0
    %534 = vmatpush1.bf16.msra.mxu0 0
    %535 = vmatprep.subr.bf16.mxu0 0
    %536 = vmatpush1.bf16.msra.mxu0 0
    %537 = vmatprep.subr.bf16.mxu0 0
    %538 = vmatpush1.bf16.msra.mxu0 0
    %539 = vmatprep.subr.bf16.mxu0 0
    %540 = vmatpush1.bf16.msra.mxu0 0
    %541 = vmatprep.subr.bf16.mxu0 0
    %542 = vmatpush1.bf16.msra.mxu0 0
    %543 = vmatprep.subr.bf16.mxu0 0
    %544 = vmatpush1.bf16.msra.mxu0 0
    %545 = vmatprep.subr.bf16.mxu0 0
    %546 = vmatpush1.bf16.msra.mxu0 0
    %547 = vmatprep.subr.bf16.mxu0 0
    %548 = vmatpush1.bf16.msra.mxu0 0
    %549 = vmatprep.mubr.bf16.mxu0 0
    %550 = vmatmul.mubr.bf16.gmra.mrb[0].mxu0 %v422
    %v551 = vpop.f32.mrb[0].mxu0
    %v552 = vadd.f32 0.0, %v551
    %v553 = vpop.f32.mrb[0].mxu0
    %v554 = vpop.f32.mrb[0].mxu0
    %v555 = vadd.f32 0.0, %v554
    %v556 = vpop.f32.mrb[0].mxu0
    %557 = vmatprep.mubr.bf16.mxu0 0
    %558 = vmatmul.mubr.bf16.gmra.mrb[0].mxu0 %v425
    %v559 = vpop.f32.mrb[0].mxu0
    %v560 = vadd.f32 0.0, %v559
    %v561 = vpop.f32.mrb[0].mxu0
    %v562 = vpop.f32.mrb[0].mxu0
    %v563 = vadd.f32 0.0, %v562
    %v564 = vpop.f32.mrb[0].mxu0
    %565 = vmatprep.mubr.bf16.mxu0 0
    %566 = vmatmul.mubr.bf16.gmra.mrb[0].mxu0 %v428
    %v567 = vpop.f32.mrb[0].mxu0
    %v568 = vadd.f32 0.0, %v567
    %v569 = vpop.f32.mrb[0].mxu0
    %v570 = vpop.f32.mrb[0].mxu0
    %v571 = vadd.f32 0.0, %v570
    %v572 = vpop.f32.mrb[0].mxu0
    %573 = vmatprep.mubr.bf16.mxu0 0
    %574 = vmatmul.mubr.bf16.gmra.mrb[0].mxu0 %v431
    %v575 = vpop.f32.mrb[0].mxu0
    %v576 = vadd.f32 0.0, %v575
    %v577 = vpop.f32.mrb[0].mxu0
    %v578 = vpop.f32.mrb[0].mxu0
    %v579 = vadd.f32 0.0, %v578
    %v580 = vpop.f32.mrb[0].mxu0
    %581 = vmatprep.mubr.bf16.mxu0 0
    %582 = vmatmul.mubr.bf16.gmra.mrb[0].mxu0 %v434
    %v583 = vpop.f32.mrb[0].mxu0
    %v584 = vadd.f32 0.0, %v583
    %v585 = vpop.f32.mrb[0].mxu0
    %v586 = vpop.f32.mrb[0].mxu0
    %v587 = vadd.f32 0.0, %v586
    %v588 = vpop.f32.mrb[0].mxu0
    %589 = vmatprep.mubr.bf16.mxu0 0
    %590 = vmatmul.mubr.bf16.gmra.mrb[0].mxu0 %v437
    %v591 = vpop.f32.mrb[0].mxu0
    %v592 = vadd.f32 0.0, %v591
    %v593 = vpop.f32.mrb[0].mxu0
    %v594 = vpop.f32.mrb[0].mxu0
    %v595 = vadd.f32 0.0, %v594
    %v596 = vpop.f32.mrb[0].mxu0
    %597 = vmatprep.mubr.bf16.mxu0 0
    %598 = vmatmul.mubr.bf16.gmra.mrb[0].mxu0 %v440
    %v599 = vpop.f32.mrb[0].mxu0
    %v600 = vadd.f32 0.0, %v599
    %v601 = vpop.f32.mrb[0].mxu0
    %v602 = vpop.f32.mrb[0].mxu0
    %v603 = vadd.f32 0.0, %v602
    %v604 = vpop.f32.mrb[0].mxu0
    %605 = vmatprep.mubr.bf16.mxu0 0
    %606 = vmatmul.mubr.bf16.gmra.mrb[0].mxu0 %v443
    %v607 = vpop.f32.mrb[0].mxu0
    %v608 = vadd.f32 0.0, %v607
    %v609 = vpop.f32.mrb[0].mxu0
    %v610 = vpop.f32.mrb[0].mxu0
    %v611 = vadd.f32 0.0, %v610
    %v612 = vpop.f32.mrb[0].mxu0
    %613 = vmatprep.mubr.bf16.mxu0 0
    %614 = vmatmul.mubr.bf16.gmra.mrb[0].mxu0 %v446
    %v615 = vpop.f32.mrb[0].mxu0
    %v616 = vadd.f32 0.0, %v615
    %v617 = vpop.f32.mrb[0].mxu0
    %v618 = vpop.f32.mrb[0].mxu0
    %v619 = vadd.f32 0.0, %v618
    %v620 = vpop.f32.mrb[0].mxu0
    %621 = vmatprep.mubr.bf16.mxu0 0
    %622 = vmatmul.mubr.bf16.gmra.mrb[0].mxu0 %v449
    %v623 = vpop.f32.mrb[0].mxu0
    %v624 = vadd.f32 0.0, %v623
    %v625 = vpop.f32.mrb[0].mxu0
    %v626 = vpop.f32.mrb[0].mxu0
    %v627 = vadd.f32 0.0, %v626
    %v628 = vpop.f32.mrb[0].mxu0
    %629 = vmatprep.mubr.bf16.mxu0 0
    %630 = vmatmul.mubr.bf16.gmra.mrb[0].mxu0 %v452
    %v631 = vpop.f32.mrb[0].mxu0
    %v632 = vadd.f32 0.0, %v631
    %v633 = vpop.f32.mrb[0].mxu0
    %v634 = vpop.f32.mrb[0].mxu0
    %v635 = vadd.f32 0.0, %v634
    %v636 = vpop.f32.mrb[0].mxu0
    %637 = vmatprep.mubr.bf16.mxu0 0
    %638 = vmatmul.mubr.bf16.gmra.mrb[0].mxu0 %v455
    %v639 = vpop.f32.mrb[0].mxu0
    %v640 = vadd.f32 0.0, %v639
    %v641 = vpop.f32.mrb[0].mxu0
    %v642 = vpop.f32.mrb[0].mxu0
    %v643 = vadd.f32 0.0, %v642
    %v644 = vpop.f32.mrb[0].mxu0
    %645 = vmatprep.mubr.bf16.mxu0 0
    %646 = vmatmul.mubr.bf16.gmra.mrb[0].mxu0 %v458
    %v647 = vpop.f32.mrb[0].mxu0
    %v648 = vadd.f32 0.0, %v647
    %v649 = vpop.f32.mrb[0].mxu0
    %v650 = vpop.f32.mrb[0].mxu0
    %v651 = vadd.f32 0.0, %v650
    %v652 = vpop.f32.mrb[0].mxu0
    %653 = vmatprep.mubr.bf16.mxu0 0
    %654 = vmatmul.mubr.bf16.gmra.mrb[0].mxu0 %v461
    %v655 = vpop.f32.mrb[0].mxu0
    %v656 = vadd.f32 0.0, %v655
    %v657 = vpop.f32.mrb[0].mxu0
    %v658 = vpop.f32.mrb[0].mxu0
    %v659 = vadd.f32 0.0, %v658
    %v660 = vpop.f32.mrb[0].mxu0
    %661 = vmatprep.mubr.bf16.mxu0 0
    %662 = vmatmul.mubr.bf16.gmra.mrb[0].mxu0 %v464
    %v663 = vpop.f32.mrb[0].mxu0
    %v664 = vadd.f32 0.0, %v663
    %v665 = vpop.f32.mrb[0].mxu0
    %v666 = vpop.f32.mrb[0].mxu0
    %v667 = vadd.f32 0.0, %v666
    %v668 = vpop.f32.mrb[0].mxu0
    %669 = vmatprep.mubr.bf16.mxu0 0
    %670 = vmatmul.mubr.bf16.gmra.mrb[0].mxu0 %v467
    %v671 = vpop.f32.mrb[0].mxu0
    %v672 = vadd.f32 0.0, %v671
    %v673 = vpop.f32.mrb[0].mxu0
    %v674 = vpop.f32.mrb[0].mxu0
    %v675 = vadd.f32 0.0, %v674
    %v676 = vpop.f32.mrb[0].mxu0
    %677 = vmatprep.mubr.bf16.mxu0 0
    %678 = vmatmul.mubr.bf16.gmra.mrb[0].mxu0 %v470
    %v679 = vpop.f32.mrb[0].mxu0
    %v680 = vadd.f32 0.0, %v679
    %v681 = vpop.f32.mrb[0].mxu0
    %v682 = vpop.f32.mrb[0].mxu0
    %v683 = vadd.f32 0.0, %v682
    %v684 = vpop.f32.mrb[0].mxu0
    %685 = vmatprep.mubr.bf16.mxu0 0
    %686 = vmatmul.mubr.bf16.gmra.mrb[0].mxu0 %v473
    %v687 = vpop.f32.mrb[0].mxu0
    %v688 = vadd.f32 0.0, %v687
    %v689 = vpop.f32.mrb[0].mxu0
    %v690 = vpop.f32.mrb[0].mxu0
    %v691 = vadd.f32 0.0, %v690
    %v692 = vpop.f32.mrb[0].mxu0
    %693 = vmatprep.mubr.bf16.mxu0 0
    %694 = vmatmul.mubr.bf16.gmra.mrb[0].mxu0 %v476
    %v695 = vpop.f32.mrb[0].mxu0
    %v696 = vadd.f32 0.0, %v695
    %v697 = vpop.f32.mrb[0].mxu0
    %v698 = vpop.f32.mrb[0].mxu0
    %v699 = vadd.f32 0.0, %v698
    %v700 = vpop.f32.mrb[0].mxu0
    %701 = vmatprep.mubr.bf16.mxu0 0
    %702 = vmatmul.mubr.bf16.gmra.mrb[0].mxu0 %v479
    %v703 = vpop.f32.mrb[0].mxu0
    %v704 = vadd.f32 0.0, %v703
    %v705 = vpop.f32.mrb[0].mxu0
    %v706 = vpop.f32.mrb[0].mxu0
    %v707 = vadd.f32 0.0, %v706
    %v708 = vpop.f32.mrb[0].mxu0
    %709 = vmatprep.mubr.bf16.mxu0 0
    %710 = vmatmul.mubr.bf16.gmra.mrb[0].mxu0 %v482
    %v711 = vpop.f32.mrb[0].mxu0
    %v712 = vadd.f32 0.0, %v711
    %v713 = vpop.f32.mrb[0].mxu0
    %v714 = vpop.f32.mrb[0].mxu0
    %v715 = vadd.f32 0.0, %v714
    %v716 = vpop.f32.mrb[0].mxu0
    %717 = vmatprep.mubr.bf16.mxu0 0
    %718 = vmatmul.mubr.bf16.gmra.mrb[0].mxu0 %v485
    %v719 = vpop.f32.mrb[0].mxu0
    %v720 = vadd.f32 0.0, %v719
    %v721 = vpop.f32.mrb[0].mxu0
    %v722 = vpop.f32.mrb[0].mxu0
    %v723 = vadd.f32 0.0, %v722
    %v724 = vpop.f32.mrb[0].mxu0
    %725 = vmatprep.mubr.bf16.mxu0 0
    %726 = vmatmul.mubr.bf16.gmra.mrb[0].mxu0 %v488
    %v727 = vpop.f32.mrb[0].mxu0
    %v728 = vadd.f32 0.0, %v727
    %v729 = vpop.f32.mrb[0].mxu0
    %v730 = vpop.f32.mrb[0].mxu0
    %v731 = vadd.f32 0.0, %v730
    %v732 = vpop.f32.mrb[0].mxu0
    %733 = vmatprep.mubr.bf16.mxu0 0
    %734 = vmatmul.mubr.bf16.gmra.mrb[0].mxu0 %v491
    %v735 = vpop.f32.mrb[0].mxu0
    %v736 = vadd.f32 0.0, %v735
    %v737 = vpop.f32.mrb[0].mxu0
    %v738 = vpop.f32.mrb[0].mxu0
    %v739 = vadd.f32 0.0, %v738
    %v740 = vpop.f32.mrb[0].mxu0
    %741 = vmatprep.mubr.bf16.mxu0 0
    %742 = vmatmul.mubr.bf16.gmra.mrb[0].mxu0 %v494
    %v743 = vpop.f32.mrb[0].mxu0
    %v744 = vadd.f32 0.0, %v743
    %v745 = vpop.f32.mrb[0].mxu0
    %v746 = vpop.f32.mrb[0].mxu0
    %v747 = vadd.f32 0.0, %v746
    %v748 = vpop.f32.mrb[0].mxu0
    %749 = vmatprep.mubr.bf16.mxu0 0
    %750 = vmatmul.mubr.bf16.gmra.mrb[0].mxu0 %v497
    %v751 = vpop.f32.mrb[0].mxu0
    %v752 = vadd.f32 0.0, %v751
    %v753 = vpop.f32.mrb[0].mxu0
    %v754 = vpop.f32.mrb[0].mxu0
    %v755 = vadd.f32 0.0, %v754
    %v756 = vpop.f32.mrb[0].mxu0
    %757 = vmatprep.mubr.bf16.mxu0 0
    %758 = vmatmul.mubr.bf16.gmra.mrb[0].mxu0 %v500
    %v759 = vpop.f32.mrb[0].mxu0
    %v760 = vadd.f32 0.0, %v759
    %v761 = vpop.f32.mrb[0].mxu0
    %v762 = vpop.f32.mrb[0].mxu0
    %v763 = vadd.f32 0.0, %v762
    %v764 = vpop.f32.mrb[0].mxu0
    %765 = vmatprep.mubr.bf16.mxu0 0
    %766 = vmatmul.mubr.bf16.gmra.mrb[0].mxu0 %v503
    %v767 = vpop.f32.mrb[0].mxu0
    %v768 = vadd.f32 0.0, %v767
    %v769 = vpop.f32.mrb[0].mxu0
    %v770 = vpop.f32.mrb[0].mxu0
    %v771 = vadd.f32 0.0, %v770
    %v772 = vpop.f32.mrb[0].mxu0
    %773 = vmatprep.mubr.bf16.mxu0 0
    %774 = vmatmul.mubr.bf16.gmra.mrb[0].mxu0 %v506
    %v775 = vpop.f32.mrb[0].mxu0
    %v776 = vadd.f32 0.0, %v775
    %v777 = vpop.f32.mrb[0].mxu0
    %v778 = vpop.f32.mrb[0].mxu0
    %v779 = vadd.f32 0.0, %v778
    %v780 = vpop.f32.mrb[0].mxu0
    %781 = vmatprep.mubr.bf16.mxu0 0
    %782 = vmatmul.mubr.bf16.gmra.mrb[0].mxu0 %v509
    %v783 = vpop.f32.mrb[0].mxu0
    %v784 = vadd.f32 0.0, %v783
    %v785 = vpop.f32.mrb[0].mxu0
    %v786 = vpop.f32.mrb[0].mxu0
    %v787 = vadd.f32 0.0, %v786
    %v788 = vpop.f32.mrb[0].mxu0
    %789 = vmatprep.mubr.bf16.mxu0 0
    %790 = vmatmul.mubr.bf16.gmra.mrb[0].mxu0 %v512
    %v791 = vpop.f32.mrb[0].mxu0
    %v792 = vadd.f32 0.0, %v791
    %v793 = vpop.f32.mrb[0].mxu0
    %v794 = vpop.f32.mrb[0].mxu0
    %v795 = vadd.f32 0.0, %v794
    %v796 = vpop.f32.mrb[0].mxu0
    %797 = vmatprep.mubr.bf16.mxu0 0
    %798 = vmatmul.mubr.bf16.gmra.mrb[0].mxu0 %v515
    %v799 = vpop.f32.mrb[0].mxu0
    %v800 = vadd.f32 0.0, %v799
    %v801 = vpop.f32.mrb[0].mxu0
    %v802 = vpop.f32.mrb[0].mxu0
    %v803 = vadd.f32 0.0, %v802
    %v804 = vpop.f32.mrb[0].mxu0
    %805 = vdwg.mxu0
    %v806 = vadd.f32 %v84, %v552
    %v807 = vadd.f32 %v85, %v555
    %v808 = vadd.f32 %v86, %v560
    %v809 = vadd.f32 %v87, %v563
    %v810 = vadd.f32 %v88, %v568
    %v811 = vadd.f32 %v89, %v571
    %v812 = vadd.f32 %v90, %v576
    %v813 = vadd.f32 %v91, %v579
    %v814 = vadd.f32 %v92, %v584
    %v815 = vadd.f32 %v93, %v587
    %v816 = vadd.f32 %v94, %v592
    %v817 = vadd.f32 %v95, %v595
    %v818 = vadd.f32 %v96, %v600
    %v819 = vadd.f32 %v97, %v603
    %v820 = vadd.f32 %v98, %v608
    %v821 = vadd.f32 %v99, %v611
    %v822 = vadd.f32 %v100, %v616
    %v823 = vadd.f32 %v101, %v619
    %v824 = vadd.f32 %v102, %v624
    %v825 = vadd.f32 %v103, %v627
    %v826 = vadd.f32 %v104, %v632
    %v827 = vadd.f32 %v105, %v635
    %v828 = vadd.f32 %v106, %v640
    %v829 = vadd.f32 %v107, %v643
    %v830 = vadd.f32 %v108, %v648
    %v831 = vadd.f32 %v109, %v651
    %v832 = vadd.f32 %v110, %v656
    %v833 = vadd.f32 %v111, %v659
    %v834 = vadd.f32 %v112, %v664
    %v835 = vadd.f32 %v113, %v667
    %v836 = vadd.f32 %v114, %v672
    %v837 = vadd.f32 %v115, %v675
    %v838 = vadd.f32 %v116, %v680
    %v839 = vadd.f32 %v117, %v683
    %v840 = vadd.f32 %v118, %v688
    %v841 = vadd.f32 %v119, %v691
    %v842 = vadd.f32 %v120, %v696
    %v843 = vadd.f32 %v121, %v699
    %v844 = vadd.f32 %v122, %v704
    %v845 = vadd.f32 %v123, %v707
    %v846 = vadd.f32 %v124, %v712
    %v847 = vadd.f32 %v125, %v715
    %v848 = vadd.f32 %v126, %v720
    %v849 = vadd.f32 %v127, %v723
    %v850 = vadd.f32 %v128, %v728
    %v851 = vadd.f32 %v129, %v731
    %v852 = vadd.f32 %v130, %v736
    %v853 = vadd.f32 %v131, %v739
    %v854 = vadd.f32 %v132, %v744
    %v855 = vadd.f32 %v133, %v747
    %v856 = vadd.f32 %v134, %v752
    %v857 = vadd.f32 %v135, %v755
    %v858 = vadd.f32 %v136, %v760
    %v859 = vadd.f32 %v137, %v763
    %v860 = vadd.f32 %v138, %v768
    %v861 = vadd.f32 %v139, %v771
    %v862 = vadd.f32 %v140, %v776
    %v863 = vadd.f32 %v141, %v779
    %v864 = vadd.f32 %v142, %v784
    %v865 = vadd.f32 %v143, %v787
    %v866 = vadd.f32 %v144, %v792
    %v867 = vadd.f32 %v145, %v795
    %v868 = vadd.f32 %v146, %v800
    %v869 = vadd.f32 %v147, %v803
    %870 = vst [vmem:[#allocation2] sm:$0xff] %v806
    %871 = vst [vmem:[#allocation2 + $0x8] sm:$0xff] %v807
    %872 = vst [vmem:[#allocation2 + $0x10] sm:$0xff] %v808
    %873 = vst [vmem:[#allocation2 + $0x18] sm:$0xff] %v809
    %874 = vst [vmem:[#allocation2 + $0x20] sm:$0xff] %v810
    %875 = vst [vmem:[#allocation2 + $0x28] sm:$0xff] %v811
    %876 = vst [vmem:[#allocation2 + $0x30] sm:$0xff] %v812
    %877 = vst [vmem:[#allocation2 + $0x38] sm:$0xff] %v813
    %878 = vst [vmem:[#allocation2 + $0x40] sm:$0xff] %v814
    %879 = vst [vmem:[#allocation2 + $0x48] sm:$0xff] %v815
    %880 = vst [vmem:[#allocation2 + $0x50] sm:$0xff] %v816
    %881 = vst [vmem:[#allocation2 + $0x58] sm:$0xff] %v817
    %882 = vst [vmem:[#allocation2 + $0x60] sm:$0xff] %v818
    %883 = vst [vmem:[#allocation2 + $0x68] sm:$0xff] %v819
    %884 = vst [vmem:[#allocation2 + $0x70] sm:$0xff] %v820
    %885 = vst [vmem:[#allocation2 + $0x78] sm:$0xff] %v821
    %886 = vst [vmem:[#allocation2 + $0x80] sm:$0xff] %v822
    %887 = vst [vmem:[#allocation2 + $0x88] sm:$0xff] %v823
    %888 = vst [vmem:[#allocation2 + $0x90] sm:$0xff] %v824
    %889 = vst [vmem:[#allocation2 + $0x98] sm:$0xff] %v825
    %890 = vst [vmem:[#allocation2 + $0xa0] sm:$0xff] %v826
    %891 = vst [vmem:[#allocation2 + $0xa8] sm:$0xff] %v827
    %892 = vst [vmem:[#allocation2 + $0xb0] sm:$0xff] %v828
    %893 = vst [vmem:[#allocation2 + $0xb8] sm:$0xff] %v829
    %894 = vst [vmem:[#allocation2 + $0xc0] sm:$0xff] %v830
    %895 = vst [vmem:[#allocation2 + $0xc8] sm:$0xff] %v831
    %896 = vst [vmem:[#allocation2 + $0xd0] sm:$0xff] %v832
    %897 = vst [vmem:[#allocation2 + $0xd8] sm:$0xff] %v833
    %898 = vst [vmem:[#allocation2 + $0xe0] sm:$0xff] %v834
    %899 = vst [vmem:[#allocation2 + $0xe8] sm:$0xff] %v835
    %900 = vst [vmem:[#allocation2 + $0xf0] sm:$0xff] %v836
    %901 = vst [vmem:[#allocation2 + $0xf8] sm:$0xff] %v837
    %902 = vst [vmem:[#allocation2 + $0x100] sm:$0xff] %v838
    %903 = vst [vmem:[#allocation2 + $0x108] sm:$0xff] %v839
    %904 = vst [vmem:[#allocation2 + $0x110] sm:$0xff] %v840
    %905 = vst [vmem:[#allocation2 + $0x118] sm:$0xff] %v841
    %906 = vst [vmem:[#allocation2 + $0x120] sm:$0xff] %v842
    %907 = vst [vmem:[#allocation2 + $0x128] sm:$0xff] %v843
    %908 = vst [vmem:[#allocation2 + $0x130] sm:$0xff] %v844
    %909 = vst [vmem:[#allocation2 + $0x138] sm:$0xff] %v845
    %910 = vst [vmem:[#allocation2 + $0x140] sm:$0xff] %v846
    %911 = vst [vmem:[#allocation2 + $0x148] sm:$0xff] %v847
    %912 = vst [vmem:[#allocation2 + $0x150] sm:$0xff] %v848
    %913 = vst [vmem:[#allocation2 + $0x158] sm:$0xff] %v849
    %914 = vst [vmem:[#allocation2 + $0x160] sm:$0xff] %v850
    %915 = vst [vmem:[#allocation2 + $0x168] sm:$0xff] %v851
    %916 = vst [vmem:[#allocation2 + $0x170] sm:$0xff] %v852
    %917 = vst [vmem:[#allocation2 + $0x178] sm:$0xff] %v853
    %918 = vst [vmem:[#allocation2 + $0x180] sm:$0xff] %v854
    %919 = vst [vmem:[#allocation2 + $0x188] sm:$0xff] %v855
    %920 = vst [vmem:[#allocation2 + $0x190] sm:$0xff] %v856
    %921 = vst [vmem:[#allocation2 + $0x198] sm:$0xff] %v857
    %922 = vst [vmem:[#allocation2 + $0x1a0] sm:$0xff] %v858
    %923 = vst [vmem:[#allocation2 + $0x1a8] sm:$0xff] %v859
    %924 = vst [vmem:[#allocation2 + $0x1b0] sm:$0xff] %v860
    %925 = vst [vmem:[#allocation2 + $0x1b8] sm:$0xff] %v861
    %926 = vst [vmem:[#allocation2 + $0x1c0] sm:$0xff] %v862
    %927 = vst [vmem:[#allocation2 + $0x1c8] sm:$0xff] %v863
    %928 = vst [vmem:[#allocation2 + $0x1d0] sm:$0xff] %v864
    %929 = vst [vmem:[#allocation2 + $0x1d8] sm:$0xff] %v865
    %930 = vst [vmem:[#allocation2 + $0x1e0] sm:$0xff] %v866
    %931 = vst [vmem:[#allocation2 + $0x1e8] sm:$0xff] %v867
    %932 = vst [vmem:[#allocation2 + $0x1f0] sm:$0xff] %v868
    %933 = vst [vmem:[#allocation2 + $0x1f8] sm:$0xff] %v869
    // Predicated region
    $region18: #{tpu_custom_call.1} parent=1 // pred_check
      %p934 = pneg %p16
    $region19: #{tpu_custom_call.1} parent=1 // pred_check_branch
      %936 = sbr.rel (%p934) target = $region21
    $region20: #{tpu_custom_call.1} parent=1 // pred_region
      %v937 = vld [vmem:[#allocation2] sm:$0xff]
      %v938 = vld [vmem:[#allocation2 + $0x8] sm:$0xff]
      %v939 = vld [vmem:[#allocation2 + $0x10] sm:$0xff]
      %v940 = vld [vmem:[#allocation2 + $0x18] sm:$0xff]
      %v941 = vld [vmem:[#allocation2 + $0x20] sm:$0xff]
      %v942 = vld [vmem:[#allocation2 + $0x28] sm:$0xff]
      %v943 = vld [vmem:[#allocation2 + $0x30] sm:$0xff]
      %v944 = vld [vmem:[#allocation2 + $0x38] sm:$0xff]
      %v945 = vld [vmem:[#allocation2 + $0x40] sm:$0xff]
      %v946 = vld [vmem:[#allocation2 + $0x48] sm:$0xff]
      %v947 = vld [vmem:[#allocation2 + $0x50] sm:$0xff]
      %v948 = vld [vmem:[#allocation2 + $0x58] sm:$0xff]
      %v949 = vld [vmem:[#allocation2 + $0x60] sm:$0xff]
      %v950 = vld [vmem:[#allocation2 + $0x68] sm:$0xff]
      %v951 = vld [vmem:[#allocation2 + $0x70] sm:$0xff]
      %v952 = vld [vmem:[#allocation2 + $0x78] sm:$0xff]
      %v953 = vld [vmem:[#allocation2 + $0x80] sm:$0xff]
      %v954 = vld [vmem:[#allocation2 + $0x88] sm:$0xff]
      %v955 = vld [vmem:[#allocation2 + $0x90] sm:$0xff]
      %v956 = vld [vmem:[#allocation2 + $0x98] sm:$0xff]
      %v957 = vld [vmem:[#allocation2 + $0xa0] sm:$0xff]
      %v958 = vld [vmem:[#allocation2 + $0xa8] sm:$0xff]
      %v959 = vld [vmem:[#allocation2 + $0xb0] sm:$0xff]
      %v960 = vld [vmem:[#allocation2 + $0xb8] sm:$0xff]
      %v961 = vld [vmem:[#allocation2 + $0xc0] sm:$0xff]
      %v962 = vld [vmem:[#allocation2 + $0xc8] sm:$0xff]
      %v963 = vld [vmem:[#allocation2 + $0xd0] sm:$0xff]
      %v964 = vld [vmem:[#allocation2 + $0xd8] sm:$0xff]
      %v965 = vld [vmem:[#allocation2 + $0xe0] sm:$0xff]
      %v966 = vld [vmem:[#allocation2 + $0xe8] sm:$0xff]
      %v967 = vld [vmem:[#allocation2 + $0xf0] sm:$0xff]
      %v968 = vld [vmem:[#allocation2 + $0xf8] sm:$0xff]
      %v969 = vld [vmem:[#allocation2 + $0x100] sm:$0xff]
      %v970 = vld [vmem:[#allocation2 + $0x108] sm:$0xff]
      %v971 = vld [vmem:[#allocation2 + $0x110] sm:$0xff]
      %v972 = vld [vmem:[#allocation2 + $0x118] sm:$0xff]
      %v973 = vld [vmem:[#allocation2 + $0x120] sm:$0xff]
      %v974 = vld [vmem:[#allocation2 + $0x128] sm:$0xff]
      %v975 = vld [vmem:[#allocation2 + $0x130] sm:$0xff]
      %v976 = vld [vmem:[#allocation2 + $0x138] sm:$0xff]
      %v977 = vld [vmem:[#allocation2 + $0x140] sm:$0xff]
      %v978 = vld [vmem:[#allocation2 + $0x148] sm:$0xff]
      %v979 = vld [vmem:[#allocation2 + $0x150] sm:$0xff]
      %v980 = vld [vmem:[#allocation2 + $0x158] sm:$0xff]
      %v981 = vld [vmem:[#allocation2 + $0x160] sm:$0xff]
      %v982 = vld [vmem:[#allocation2 + $0x168] sm:$0xff]
      %v983 = vld [vmem:[#allocation2 + $0x170] sm:$0xff]
      %v984 = vld [vmem:[#allocation2 + $0x178] sm:$0xff]
      %v985 = vld [vmem:[#allocation2 + $0x180] sm:$0xff]
      %v986 = vld [vmem:[#allocation2 + $0x188] sm:$0xff]
      %v987 = vld [vmem:[#allocation2 + $0x190] sm:$0xff]
      %v988 = vld [vmem:[#allocation2 + $0x198] sm:$0xff]
      %v989 = vld [vmem:[#allocation2 + $0x1a0] sm:$0xff]
      %v990 = vld [vmem:[#allocation2 + $0x1a8] sm:$0xff]
      %v991 = vld [vmem:[#allocation2 + $0x1b0] sm:$0xff]
      %v992 = vld [vmem:[#allocation2 + $0x1b8] sm:$0xff]
      %v993 = vld [vmem:[#allocation2 + $0x1c0] sm:$0xff]
      %v994 = vld [vmem:[#allocation2 + $0x1c8] sm:$0xff]
      %v995 = vld [vmem:[#allocation2 + $0x1d0] sm:$0xff]
      %v996 = vld [vmem:[#allocation2 + $0x1d8] sm:$0xff]
      %v997 = vld [vmem:[#allocation2 + $0x1e0] sm:$0xff]
      %v998 = vld [vmem:[#allocation2 + $0x1e8] sm:$0xff]
      %v999 = vld [vmem:[#allocation2 + $0x1f0] sm:$0xff]
      %v1000 = vld [vmem:[#allocation2 + $0x1f8] sm:$0xff]
      %v1001 = vld [vmem:[%s2] sm:$0x1]
      %v1003 = vlaneseq
      %v1004 = vshrl.u32 %v1003, 7
      %v1005 = vsub.s32 0, %v1004
      %v1006 = vrot.slane %v1001, %v1005
      %v1008 = vadd.f32 %v937, %v1006
      %v1009 = vadd.f32 %v938, %v1006
      %v1010 = vadd.f32 %v939, %v1006
      %v1011 = vadd.f32 %v940, %v1006
      %v1012 = vadd.f32 %v941, %v1006
      %v1013 = vadd.f32 %v942, %v1006
      %v1014 = vadd.f32 %v943, %v1006
      %v1015 = vadd.f32 %v944, %v1006
      %v1016 = vadd.f32 %v945, %v1006
      %v1017 = vadd.f32 %v946, %v1006
      %v1018 = vadd.f32 %v947, %v1006
      %v1019 = vadd.f32 %v948, %v1006
      %v1020 = vadd.f32 %v949, %v1006
      %v1021 = vadd.f32 %v950, %v1006
      %v1022 = vadd.f32 %v951, %v1006
      %v1023 = vadd.f32 %v952, %v1006
      %v1024 = vadd.f32 %v953, %v1006
      %v1025 = vadd.f32 %v954, %v1006
      %v1026 = vadd.f32 %v955, %v1006
      %v1027 = vadd.f32 %v956, %v1006
      %v1028 = vadd.f32 %v957, %v1006
      %v1029 = vadd.f32 %v958, %v1006
      %v1030 = vadd.f32 %v959, %v1006
      %v1031 = vadd.f32 %v960, %v1006
      %v1032 = vadd.f32 %v961, %v1006
      %v1033 = vadd.f32 %v962, %v1006
      %v1034 = vadd.f32 %v963, %v1006
      %v1035 = vadd.f32 %v964, %v1006
      %v1036 = vadd.f32 %v965, %v1006
      %v1037 = vadd.f32 %v966, %v1006
      %v1038 = vadd.f32 %v967, %v1006
      %v1039 = vadd.f32 %v968, %v1006
      %v1040 = vadd.f32 %v969, %v1006
      %v1041 = vadd.f32 %v970, %v1006
      %v1042 = vadd.f32 %v971, %v1006
      %v1043 = vadd.f32 %v972, %v1006
      %v1044 = vadd.f32 %v973, %v1006
      %v1045 = vadd.f32 %v974, %v1006
      %v1046 = vadd.f32 %v975, %v1006
      %v1047 = vadd.f32 %v976, %v1006
      %v1048 = vadd.f32 %v977, %v1006
      %v1049 = vadd.f32 %v978, %v1006
      %v1050 = vadd.f32 %v979, %v1006
      %v1051 = vadd.f32 %v980, %v1006
      %v1052 = vadd.f32 %v981, %v1006
      %v1053 = vadd.f32 %v982, %v1006
      %v1054 = vadd.f32 %v983, %v1006
      %v1055 = vadd.f32 %v984, %v1006
      %v1056 = vadd.f32 %v985, %v1006
      %v1057 = vadd.f32 %v986, %v1006
      %v1058 = vadd.f32 %v987, %v1006
      %v1059 = vadd.f32 %v988, %v1006
      %v1060 = vadd.f32 %v989, %v1006
      %v1061 = vadd.f32 %v990, %v1006
      %v1062 = vadd.f32 %v991, %v1006
      %v1063 = vadd.f32 %v992, %v1006
      %v1064 = vadd.f32 %v993, %v1006
      %v1065 = vadd.f32 %v994, %v1006
      %v1066 = vadd.f32 %v995, %v1006
      %v1067 = vadd.f32 %v996, %v1006
      %v1068 = vadd.f32 %v997, %v1006
      %v1069 = vadd.f32 %v998, %v1006
      %v1070 = vadd.f32 %v999, %v1006
      %v1071 = vadd.f32 %v1000, %v1006
      %vm1072 = vcmp.ge.f32.partialorder %v1008, 0.0
      %vm1073 = vcmp.ge.f32.partialorder %v1009, 0.0
      %vm1074 = vcmp.ge.f32.partialorder %v1010, 0.0
      %vm1075 = vcmp.ge.f32.partialorder %v1011, 0.0
      %vm1076 = vcmp.ge.f32.partialorder %v1012, 0.0
      %vm1077 = vcmp.ge.f32.partialorder %v1013, 0.0
      %vm1078 = vcmp.ge.f32.partialorder %v1014, 0.0
      %vm1079 = vcmp.ge.f32.partialorder %v1015, 0.0
      %vm1080 = vcmp.ge.f32.partialorder %v1016, 0.0
      %vm1081 = vcmp.ge.f32.partialorder %v1017, 0.0
      %vm1082 = vcmp.ge.f32.partialorder %v1018, 0.0
      %vm1083 = vcmp.ge.f32.partialorder %v1019, 0.0
      %vm1084 = vcmp.ge.f32.partialorder %v1020, 0.0
      %vm1085 = vcmp.ge.f32.partialorder %v1021, 0.0
      %vm1086 = vcmp.ge.f32.partialorder %v1022, 0.0
      %vm1087 = vcmp.ge.f32.partialorder %v1023, 0.0
      %vm1088 = vcmp.ge.f32.partialorder %v1024, 0.0
      %vm1089 = vcmp.ge.f32.partialorder %v1025, 0.0
      %vm1090 = vcmp.ge.f32.partialorder %v1026, 0.0
      %vm1091 = vcmp.ge.f32.partialorder %v1027, 0.0
      %vm1092 = vcmp.ge.f32.partialorder %v1028, 0.0
      %vm1093 = vcmp.ge.f32.partialorder %v1029, 0.0
      %vm1094 = vcmp.ge.f32.partialorder %v1030, 0.0
      %vm1095 = vcmp.ge.f32.partialorder %v1031, 0.0
      %vm1096 = vcmp.ge.f32.partialorder %v1032, 0.0
      %vm1097 = vcmp.ge.f32.partialorder %v1033, 0.0
      %vm1098 = vcmp.ge.f32.partialorder %v1034, 0.0
      %vm1099 = vcmp.ge.f32.partialorder %v1035, 0.0
      %vm1100 = vcmp.ge.f32.partialorder %v1036, 0.0
      %vm1101 = vcmp.ge.f32.partialorder %v1037, 0.0
      %vm1102 = vcmp.ge.f32.partialorder %v1038, 0.0
      %vm1103 = vcmp.ge.f32.partialorder %v1039, 0.0
      %vm1104 = vcmp.ge.f32.partialorder %v1040, 0.0
      %vm1105 = vcmp.ge.f32.partialorder %v1041, 0.0
      %vm1106 = vcmp.ge.f32.partialorder %v1042, 0.0
      %vm1107 = vcmp.ge.f32.partialorder %v1043, 0.0
      %vm1108 = vcmp.ge.f32.partialorder %v1044, 0.0
      %vm1109 = vcmp.ge.f32.partialorder %v1045, 0.0
      %vm1110 = vcmp.ge.f32.partialorder %v1046, 0.0
      %vm1111 = vcmp.ge.f32.partialorder %v1047, 0.0
      %vm1112 = vcmp.ge.f32.partialorder %v1048, 0.0
      %vm1113 = vcmp.ge.f32.partialorder %v1049, 0.0
      %vm1114 = vcmp.ge.f32.partialorder %v1050, 0.0
      %vm1115 = vcmp.ge.f32.partialorder %v1051, 0.0
      %vm1116 = vcmp.ge.f32.partialorder %v1052, 0.0
      %vm1117 = vcmp.ge.f32.partialorder %v1053, 0.0
      %vm1118 = vcmp.ge.f32.partialorder %v1054, 0.0
      %vm1119 = vcmp.ge.f32.partialorder %v1055, 0.0
      %vm1120 = vcmp.ge.f32.partialorder %v1056, 0.0
      %vm1121 = vcmp.ge.f32.partialorder %v1057, 0.0
      %vm1122 = vcmp.ge.f32.partialorder %v1058, 0.0
      %vm1123 = vcmp.ge.f32.partialorder %v1059, 0.0
      %vm1124 = vcmp.ge.f32.partialorder %v1060, 0.0
      %vm1125 = vcmp.ge.f32.partialorder %v1061, 0.0
      %vm1126 = vcmp.ge.f32.partialorder %v1062, 0.0
      %vm1127 = vcmp.ge.f32.partialorder %v1063, 0.0
      %vm1128 = vcmp.ge.f32.partialorder %v1064, 0.0
      %vm1129 = vcmp.ge.f32.partialorder %v1065, 0.0
      %vm1130 = vcmp.ge.f32.partialorder %v1066, 0.0
      %vm1131 = vcmp.ge.f32.partialorder %v1067, 0.0
      %vm1132 = vcmp.ge.f32.partialorder %v1068, 0.0
      %vm1133 = vcmp.ge.f32.partialorder %v1069, 0.0
      %vm1134 = vcmp.ge.f32.partialorder %v1070, 0.0
      %vm1135 = vcmp.ge.f32.partialorder %v1071, 0.0
      %v1136 = vmul.f32 %v1008, 0.2
      %v1137 = vmul.f32 %v1009, 0.2
      %v1138 = vmul.f32 %v1010, 0.2
      %v1139 = vmul.f32 %v1011, 0.2
      %v1140 = vmul.f32 %v1012, 0.2
      %v1141 = vmul.f32 %v1013, 0.2
      %v1142 = vmul.f32 %v1014, 0.2
      %v1143 = vmul.f32 %v1015, 0.2
      %v1144 = vmul.f32 %v1016, 0.2
      %v1145 = vmul.f32 %v1017, 0.2
      %v1146 = vmul.f32 %v1018, 0.2
      %v1147 = vmul.f32 %v1019, 0.2
      %v1148 = vmul.f32 %v1020, 0.2
      %v1149 = vmul.f32 %v1021, 0.2
      %v1150 = vmul.f32 %v1022, 0.2
      %v1151 = vmul.f32 %v1023, 0.2
      %v1152 = vmul.f32 %v1024, 0.2
      %v1153 = vmul.f32 %v1025, 0.2
      %v1154 = vmul.f32 %v1026, 0.2
      %v1155 = vmul.f32 %v1027, 0.2
      %v1156 = vmul.f32 %v1028, 0.2
      %v1157 = vmul.f32 %v1029, 0.2
      %v1158 = vmul.f32 %v1030, 0.2
      %v1159 = vmul.f32 %v1031, 0.2
      %v1160 = vmul.f32 %v1032, 0.2
      %v1161 = vmul.f32 %v1033, 0.2
      %v1162 = vmul.f32 %v1034, 0.2
      %v1163 = vmul.f32 %v1035, 0.2
      %v1164 = vmul.f32 %v1036, 0.2
      %v1165 = vmul.f32 %v1037, 0.2
      %v1166 = vmul.f32 %v1038, 0.2
      %v1167 = vmul.f32 %v1039, 0.2
      %v1168 = vmul.f32 %v1040, 0.2
      %v1169 = vmul.f32 %v1041, 0.2
      %v1170 = vmul.f32 %v1042, 0.2
      %v1171 = vmul.f32 %v1043, 0.2
      %v1172 = vmul.f32 %v1044, 0.2
      %v1173 = vmul.f32 %v1045, 0.2
      %v1174 = vmul.f32 %v1046, 0.2
      %v1175 = vmul.f32 %v1047, 0.2
      %v1176 = vmul.f32 %v1048, 0.2
      %v1177 = vmul.f32 %v1049, 0.2
      %v1178 = vmul.f32 %v1050, 0.2
      %v1179 = vmul.f32 %v1051, 0.2
      %v1180 = vmul.f32 %v1052, 0.2
      %v1181 = vmul.f32 %v1053, 0.2
      %v1182 = vmul.f32 %v1054, 0.2
      %v1183 = vmul.f32 %v1055, 0.2
      %v1184 = vmul.f32 %v1056, 0.2
      %v1185 = vmul.f32 %v1057, 0.2
      %v1186 = vmul.f32 %v1058, 0.2
      %v1187 = vmul.f32 %v1059, 0.2
      %v1188 = vmul.f32 %v1060, 0.2
      %v1189 = vmul.f32 %v1061, 0.2
      %v1190 = vmul.f32 %v1062, 0.2
      %v1191 = vmul.f32 %v1063, 0.2
      %v1192 = vmul.f32 %v1064, 0.2
      %v1193 = vmul.f32 %v1065, 0.2
      %v1194 = vmul.f32 %v1066, 0.2
      %v1195 = vmul.f32 %v1067, 0.2
      %v1196 = vmul.f32 %v1068, 0.2
      %v1197 = vmul.f32 %v1069, 0.2
      %v1198 = vmul.f32 %v1070, 0.2
      %v1199 = vmul.f32 %v1071, 0.2
      %v1200 = vsel %vm1072, %v1008, %v1136
      %v1201 = vsel %vm1073, %v1009, %v1137
      %v1202 = vsel %vm1074, %v1010, %v1138
      %v1203 = vsel %vm1075, %v1011, %v1139
      %v1204 = vsel %vm1076, %v1012, %v1140
      %v1205 = vsel %vm1077, %v1013, %v1141
      %v1206 = vsel %vm1078, %v1014, %v1142
      %v1207 = vsel %vm1079, %v1015, %v1143
      %v1208 = vsel %vm1080, %v1016, %v1144
      %v1209 = vsel %vm1081, %v1017, %v1145
      %v1210 = vsel %vm1082, %v1018, %v1146
      %v1211 = vsel %vm1083, %v1019, %v1147
      %v1212 = vsel %vm1084, %v1020, %v1148
      %v1213 = vsel %vm1085, %v1021, %v1149
      %v1214 = vsel %vm1086, %v1022, %v1150
      %v1215 = vsel %vm1087, %v1023, %v1151
      %v1216 = vsel %vm1088, %v1024, %v1152
      %v1217 = vsel %vm1089, %v1025, %v1153
      %v1218 = vsel %vm1090, %v1026, %v1154
      %v1219 = vsel %vm1091, %v1027, %v1155
      %v1220 = vsel %vm1092, %v1028, %v1156
      %v1221 = vsel %vm1093, %v1029, %v1157
      %v1222 = vsel %vm1094, %v1030, %v1158
      %v1223 = vsel %vm1095, %v1031, %v1159
      %v1224 = vsel %vm1096, %v1032, %v1160
      %v1225 = vsel %vm1097, %v1033, %v1161
      %v1226 = vsel %vm1098, %v1034, %v1162
      %v1227 = vsel %vm1099, %v1035, %v1163
      %v1228 = vsel %vm1100, %v1036, %v1164
      %v1229 = vsel %vm1101, %v1037, %v1165
      %v1230 = vsel %vm1102, %v1038, %v1166
      %v1231 = vsel %vm1103, %v1039, %v1167
      %v1232 = vsel %vm1104, %v1040, %v1168
      %v1233 = vsel %vm1105, %v1041, %v1169
      %v1234 = vsel %vm1106, %v1042, %v1170
      %v1235 = vsel %vm1107, %v1043, %v1171
      %v1236 = vsel %vm1108, %v1044, %v1172
      %v1237 = vsel %vm1109, %v1045, %v1173
      %v1238 = vsel %vm1110, %v1046, %v1174
      %v1239 = vsel %vm1111, %v1047, %v1175
      %v1240 = vsel %vm1112, %v1048, %v1176
      %v1241 = vsel %vm1113, %v1049, %v1177
      %v1242 = vsel %vm1114, %v1050, %v1178
      %v1243 = vsel %vm1115, %v1051, %v1179
      %v1244 = vsel %vm1116, %v1052, %v1180
      %v1245 = vsel %vm1117, %v1053, %v1181
      %v1246 = vsel %vm1118, %v1054, %v1182
      %v1247 = vsel %vm1119, %v1055, %v1183
      %v1248 = vsel %vm1120, %v1056, %v1184
      %v1249 = vsel %vm1121, %v1057, %v1185
      %v1250 = vsel %vm1122, %v1058, %v1186
      %v1251 = vsel %vm1123, %v1059, %v1187
      %v1252 = vsel %vm1124, %v1060, %v1188
      %v1253 = vsel %vm1125, %v1061, %v1189
      %v1254 = vsel %vm1126, %v1062, %v1190
      %v1255 = vsel %vm1127, %v1063, %v1191
      %v1256 = vsel %vm1128, %v1064, %v1192
      %v1257 = vsel %vm1129, %v1065, %v1193
      %v1258 = vsel %vm1130, %v1066, %v1194
      %v1259 = vsel %vm1131, %v1067, %v1195
      %v1260 = vsel %vm1132, %v1068, %v1196
      %v1261 = vsel %vm1133, %v1069, %v1197
      %v1262 = vsel %vm1134, %v1070, %v1198
      %v1263 = vsel %vm1135, %v1071, %v1199
      %1264 = vst [vmem:[#allocation3] sm:$0xff] %v1200
      %1265 = vst [vmem:[#allocation3 + $0x8] sm:$0xff] %v1201
      %1266 = vst [vmem:[#allocation3 + $0x10] sm:$0xff] %v1202
      %1267 = vst [vmem:[#allocation3 + $0x18] sm:$0xff] %v1203
      %1268 = vst [vmem:[#allocation3 + $0x20] sm:$0xff] %v1204
      %1269 = vst [vmem:[#allocation3 + $0x28] sm:$0xff] %v1205
      %1270 = vst [vmem:[#allocation3 + $0x30] sm:$0xff] %v1206
      %1271 = vst [vmem:[#allocation3 + $0x38] sm:$0xff] %v1207
      %1272 = vst [vmem:[#allocation3 + $0x40] sm:$0xff] %v1208
      %1273 = vst [vmem:[#allocation3 + $0x48] sm:$0xff] %v1209
      %1274 = vst [vmem:[#allocation3 + $0x50] sm:$0xff] %v1210
      %1275 = vst [vmem:[#allocation3 + $0x58] sm:$0xff] %v1211
      %1276 = vst [vmem:[#allocation3 + $0x60] sm:$0xff] %v1212
      %1277 = vst [vmem:[#allocation3 + $0x68] sm:$0xff] %v1213
      %1278 = vst [vmem:[#allocation3 + $0x70] sm:$0xff] %v1214
      %1279 = vst [vmem:[#allocation3 + $0x78] sm:$0xff] %v1215
      %1280 = vst [vmem:[#allocation3 + $0x80] sm:$0xff] %v1216
      %1281 = vst [vmem:[#allocation3 + $0x88] sm:$0xff] %v1217
      %1282 = vst [vmem:[#allocation3 + $0x90] sm:$0xff] %v1218
      %1283 = vst [vmem:[#allocation3 + $0x98] sm:$0xff] %v1219
      %1284 = vst [vmem:[#allocation3 + $0xa0] sm:$0xff] %v1220
      %1285 = vst [vmem:[#allocation3 + $0xa8] sm:$0xff] %v1221
      %1286 = vst [vmem:[#allocation3 + $0xb0] sm:$0xff] %v1222
      %1287 = vst [vmem:[#allocation3 + $0xb8] sm:$0xff] %v1223
      %1288 = vst [vmem:[#allocation3 + $0xc0] sm:$0xff] %v1224
      %1289 = vst [vmem:[#allocation3 + $0xc8] sm:$0xff] %v1225
      %1290 = vst [vmem:[#allocation3 + $0xd0] sm:$0xff] %v1226
      %1291 = vst [vmem:[#allocation3 + $0xd8] sm:$0xff] %v1227
      %1292 = vst [vmem:[#allocation3 + $0xe0] sm:$0xff] %v1228
      %1293 = vst [vmem:[#allocation3 + $0xe8] sm:$0xff] %v1229
      %1294 = vst [vmem:[#allocation3 + $0xf0] sm:$0xff] %v1230
      %1295 = vst [vmem:[#allocation3 + $0xf8] sm:$0xff] %v1231
      %1296 = vst [vmem:[#allocation3 + $0x100] sm:$0xff] %v1232
      %1297 = vst [vmem:[#allocation3 + $0x108] sm:$0xff] %v1233
      %1298 = vst [vmem:[#allocation3 + $0x110] sm:$0xff] %v1234
      %1299 = vst [vmem:[#allocation3 + $0x118] sm:$0xff] %v1235
      %1300 = vst [vmem:[#allocation3 + $0x120] sm:$0xff] %v1236
      %1301 = vst [vmem:[#allocation3 + $0x128] sm:$0xff] %v1237
      %1302 = vst [vmem:[#allocation3 + $0x130] sm:$0xff] %v1238
      %1303 = vst [vmem:[#allocation3 + $0x138] sm:$0xff] %v1239
      %1304 = vst [vmem:[#allocation3 + $0x140] sm:$0xff] %v1240
      %1305 = vst [vmem:[#allocation3 + $0x148] sm:$0xff] %v1241
      %1306 = vst [vmem:[#allocation3 + $0x150] sm:$0xff] %v1242
      %1307 = vst [vmem:[#allocation3 + $0x158] sm:$0xff] %v1243
      %1308 = vst [vmem:[#allocation3 + $0x160] sm:$0xff] %v1244
      %1309 = vst [vmem:[#allocation3 + $0x168] sm:$0xff] %v1245
      %1310 = vst [vmem:[#allocation3 + $0x170] sm:$0xff] %v1246
      %1311 = vst [vmem:[#allocation3 + $0x178] sm:$0xff] %v1247
      %1312 = vst [vmem:[#allocation3 + $0x180] sm:$0xff] %v1248
      %1313 = vst [vmem:[#allocation3 + $0x188] sm:$0xff] %v1249
      %1314 = vst [vmem:[#allocation3 + $0x190] sm:$0xff] %v1250
      %1315 = vst [vmem:[#allocation3 + $0x198] sm:$0xff] %v1251
      %1316 = vst [vmem:[#allocation3 + $0x1a0] sm:$0xff] %v1252
      %1317 = vst [vmem:[#allocation3 + $0x1a8] sm:$0xff] %v1253
      %1318 = vst [vmem:[#allocation3 + $0x1b0] sm:$0xff] %v1254
      %1319 = vst [vmem:[#allocation3 + $0x1b8] sm:$0xff] %v1255
      %1320 = vst [vmem:[#allocation3 + $0x1c0] sm:$0xff] %v1256
      %1321 = vst [vmem:[#allocation3 + $0x1c8] sm:$0xff] %v1257
      %1322 = vst [vmem:[#allocation3 + $0x1d0] sm:$0xff] %v1258
      %1323 = vst [vmem:[#allocation3 + $0x1d8] sm:$0xff] %v1259
      %1324 = vst [vmem:[#allocation3 + $0x1e0] sm:$0xff] %v1260
      %1325 = vst [vmem:[#allocation3 + $0x1e8] sm:$0xff] %v1261
      %1326 = vst [vmem:[#allocation3 + $0x1f0] sm:$0xff] %v1262
      %1327 = vst [vmem:[#allocation3 + $0x1f8] sm:$0xff] %v1263
    $region21: #{tpu_custom_call.1} parent=1 // pred_fallthru
      _
    // Predicated region
    $region22: #{tpu_custom_call.1} parent=1 // pred_check
      _
    $region23: #{tpu_custom_call.1} parent=1 // pred_check_branch
      %1329 = sbr.rel (0) target = $region25
    $region24: #{tpu_custom_call.1} parent=1 // pred_region
      %s1331 = ssub.s32 8192, 8192
      %1332 = vsyncadd [#allocation4], %s1331
      %s1333 = sshll.u32 [#allocation3], 4
      %s1334 = int_to_ptr.vmem [resolvable:$true] %s1333
      %1339 = dma.vmem_to_hbm [thread:$0]  %s1334, 8192, %s3, [#allocation4], 128, 128, 8
    $region25: #{tpu_custom_call.1} parent=1 // pred_fallthru
      _
    // Predicated region
    $region26: #{tpu_custom_call.1} parent=1 // pred_check
      _
    $region27: #{tpu_custom_call.1} parent=1 // pred_check_branch
      %1341 = sbr.rel (0) target = $region29
    $region28: #{tpu_custom_call.1} parent=1 // pred_region
      %1342 = dma.done [#allocation4], 8192
    $region29: #{tpu_custom_call.1} parent=1 // pred_fallthru
      _
    %1343 = vsyncpa [#allocation4], 1

</llo_original>
